<compile_context>
chip_gen: v5e
topology: v5e:2x2
jax: 0.10.0
libtpu: 0.0.40
codegen_flags: <defaults>
</compile_context>

<pallas_src>
import jax
import jax.numpy as jnp
from jax.experimental import pallas as pl
from jax.experimental.pallas import tpu as pltpu


def _round_up(x, m):
    return (x + m - 1) // m * m


def _fragment_kernel(x_ref, wih_ref, whh_ref, b_ref, wg_ref, o_ref, pre_ref):
    # x_ref  : (K, TN, F_in) bf16  time-major mailbox tile for TN dst nodes
    # wih_ref: (F_in, 4H)    bf16  lstm.weight_ih_l0, transposed (gates i,f,g,o)
    # whh_ref: (H, 4H)       bf16  lstm.weight_hh_l0, transposed
    # b_ref  : (1, 4H)       f32   b_ih + b_hh
    # wg_ref : (1, H)        f32   attention_sum.gate_nn.weight
    # o_ref  : (TN, H)
    # pre_ref: (K*TN, 4H)    f32 VMEM scratch: batched input projection
    k, tn, f_in = x_ref.shape
    h4 = wih_ref.shape[1]
    hdim = h4 // 4

    # (1) Batched input projection: one long-M bf16 MXU matmul covering all K
    #     steps; bias folded in here so the recurrent loop never touches it.
    x_flat = x_ref[...].reshape(k * tn, f_in)
    pre_ref[...] = (
        jnp.dot(x_flat, wih_ref[...], preferred_element_type=jnp.float32)
        + b_ref[...])

    whh = whh_ref[...]
    # Hoist the gate-weight broadcast out of the unrolled loop (no CSE in JAX).
    wg = jnp.broadcast_to(wg_ref[...], (tn, hdim))

    h_prev = jnp.zeros((tn, hdim), jnp.float32)
    c_prev = jnp.zeros((tn, hdim), jnp.float32)
    # Online-softmax running state (flash-attention style).
    m_run = jnp.full((tn, 1), -jnp.inf, jnp.float32)
    denom = jnp.zeros((tn, 1), jnp.float32)
    acc = jnp.zeros((tn, hdim), jnp.float32)

    for t in range(k):                              # static unroll over neighbors
        gates = pre_ref[pl.ds(t * tn, tn), :] + jnp.dot(
            h_prev.astype(whh.dtype), whh, preferred_element_type=jnp.float32)
        i_g = jax.nn.sigmoid(gates[:, 0 * hdim:1 * hdim])
        f_g = jax.nn.sigmoid(gates[:, 1 * hdim:2 * hdim])
        g_g = jnp.tanh(gates[:, 2 * hdim:3 * hdim])
        o_g = jax.nn.sigmoid(gates[:, 3 * hdim:4 * hdim])
        c_prev = f_g * c_prev + i_g * g_g
        h_prev = o_g * jnp.tanh(c_prev)

        # Attention-gate logit: lane reduce instead of a 1-wide MXU matmul.
        g_t = jnp.sum(h_prev * wg, axis=-1, keepdims=True)        # (TN, 1)
        m_new = jnp.maximum(m_run, g_t)
        alpha = jnp.exp(m_run - m_new)                             # exp(-inf)=0 at t=0
        p_t = jnp.exp(g_t - m_new)
        denom = alpha * denom + p_t
        acc = alpha * acc + p_t * h_prev
        m_run = m_new

    o_ref[...] = (acc * pl.reciprocal(denom, approx=True)).astype(o_ref.dtype)


def glycan_ms2_fragment_nn(feature, edge_src, w_ih, w_hh, b_ih, b_hh, w_gate,
                           *, tile_n=256):
    """
    feature : (N_src, F_in)   source-node features
    edge_src: (N_dst, K)      int32 source-node index of each in-edge per dst node
    w_ih    : (4H, F_in)      lstm.weight_ih_l0   (PyTorch layout, gates i,f,g,o)
    w_hh    : (4H, H)         lstm.weight_hh_l0
    b_ih    : (4H,)           lstm.bias_ih_l0
    b_hh    : (4H,)           lstm.bias_hh_l0
    w_gate  : (1, H)          attention_sum.gate_nn.weight
    returns : (N_dst, H)
    """
    n_dst, k = edge_src.shape
    f_in = feature.shape[1]
    h = w_hh.shape[1]
    h4 = 4 * h

    # Tile choice: multiple of 16 (bf16 sublane packing), as large as allowed,
    # but capped near N_dst/2 so the grid has >= 2 steps (v7x: 2 TensorCores).
    cap_two_cores = _round_up(max(1, (n_dst + 1) // 2), 16)
    tile_n = max(16, min(_round_up(tile_n, 16), cap_two_cores))
    n_pad = _round_up(n_dst, tile_n)
    if n_pad != n_dst:
        edge_src = jnp.concatenate(
            [edge_src, jnp.zeros((n_pad - n_dst, k), edge_src.dtype)], axis=0)

    # graph.pull message gather (glue), TIME-MAJOR and bf16: (K, N_pad, F_in).
    x_tm = jnp.take(feature, jnp.transpose(edge_src), axis=0).astype(jnp.bfloat16)

    # MXU operands in bf16; scalar-side params stay f32.
    wih_t = jnp.transpose(w_ih).astype(jnp.bfloat16)        # (F_in, 4H)
    whh_t = jnp.transpose(w_hh).astype(jnp.bfloat16)        # (H, 4H)
    bias = (b_ih + b_hh).astype(jnp.float32).reshape(1, h4)
    wg = w_gate.astype(jnp.float32).reshape(1, h)

    grid = (n_pad // tile_n,)
    out = pl.pallas_call(
        _fragment_kernel,
        out_shape=jax.ShapeDtypeStruct((n_pad, h), feature.dtype),
        grid_spec=pltpu.PrefetchScalarGridSpec(
            num_scalar_prefetch=0,
            grid=grid,
            in_specs=[
                pl.BlockSpec((k, tile_n, f_in), lambda i: (0, i, 0)),
                pl.BlockSpec((f_in, h4), lambda i: (0, 0)),
                pl.BlockSpec((h, h4), lambda i: (0, 0)),
                pl.BlockSpec((1, h4), lambda i: (0, 0)),
                pl.BlockSpec((1, h), lambda i: (0, 0)),
            ],
            out_specs=pl.BlockSpec((tile_n, h), lambda i: (i, 0)),
            scratch_shapes=[pltpu.VMEM((k * tile_n, h4), jnp.float32)],
        ),
        compiler_params=pltpu.CompilerParams(
            dimension_semantics=("parallel",)),
    )(x_tm, wih_t, whh_t, bias, wg)
    return out[:n_dst]


def _reference(feature, edge_src, w_ih, w_hh, b_ih, b_hh, w_gate):
    hi = jax.lax.Precision.HIGHEST
    h_cat = jnp.take(feature, edge_src, axis=0)            # (N, K, F_in)
    n = h_cat.shape[0]
    hdim = w_hh.shape[1]

    def step(carry, x_t):
        h_p, c_p = carry
        gates = (jnp.dot(x_t, w_ih.T, precision=hi) + b_ih
                 + jnp.dot(h_p, w_hh.T, precision=hi) + b_hh)
        i = jax.nn.sigmoid(gates[:, 0 * hdim:1 * hdim])
        f = jax.nn.sigmoid(gates[:, 1 * hdim:2 * hdim])
        g = jnp.tanh(gates[:, 2 * hdim:3 * hdim])
        o = jax.nn.sigmoid(gates[:, 3 * hdim:4 * hdim])
        c = f * c_p + i * g
        h_new = o * jnp.tanh(c)
        return (h_new, c), h_new

    xs = jnp.transpose(h_cat, (1, 0, 2))                   # (K, N, F_in)
    init = (jnp.zeros((n, hdim), jnp.float32), jnp.zeros((n, hdim), jnp.float32))
    _, hs = jax.lax.scan(step, init, xs)                   # (K, N, H)
    hs = jnp.transpose(hs, (1, 0, 2))                      # (N, K, H)
    gate = jnp.einsum("nkh,oh->nko", hs, w_gate, precision=hi)
    attn = jax.nn.softmax(gate, axis=-2)
    return jnp.sum(attn * hs, axis=-2)                     # (N, H)


if __name__ == "__main__":
    key = jax.random.PRNGKey(0)
    ks = jax.random.split(key, 7)

    N_SRC, N_DST, K = 64, 64, 4
    F_IN, F_OUT = 32, 32           # LSTM hidden size == output width
    H4 = 4 * F_OUT

    feature = jax.random.normal(ks[0], (N_SRC, F_IN), dtype=jnp.float32)
    edge_src = jax.random.randint(ks[1], (N_DST, K), 0, N_SRC, dtype=jnp.int32)

    bound = 1.0 / (F_OUT ** 0.5)
    w_ih = jax.random.uniform(ks[2], (H4, F_IN), jnp.float32, -bound, bound)
    w_hh = jax.random.uniform(ks[3], (H4, F_OUT), jnp.float32, -bound, bound)
    b_ih = jax.random.uniform(ks[4], (H4,), jnp.float32, -bound, bound)
    b_hh = jax.random.uniform(ks[5], (H4,), jnp.float32, -bound, bound)
    w_gate = jax.random.uniform(ks[6], (1, F_OUT), jnp.float32, -bound, bound)

    out = glycan_ms2_fragment_nn(feature, edge_src, w_ih, w_hh, b_ih, b_hh,
                                 w_gate, tile_n=256)
    out = jax.block_until_ready(out)

    ref = _reference(feature, edge_src, w_ih, w_hh, b_ih, b_hh, w_gate)
    assert out.shape == (N_DST, F_OUT)
    # bf16 MXU operands -> looser tolerance vs the f32 HIGHEST-precision reference.
    assert jnp.allclose(out, ref, atol=5e-2, rtol=5e-2), "mismatch vs reference"

    print("KERNEL_OK")
</pallas_src>

<mosaic_0001>
module attributes {stable_mosaic.version = 11 : i64} {
  func.func @_fragment_kernel(%arg0: i32, %arg1: memref<4x32x32xbf16, #tpu.memory_space<vmem>>, %arg2: memref<32x128xbf16, #tpu.memory_space<vmem>>, %arg3: memref<32x128xbf16, #tpu.memory_space<vmem>>, %arg4: memref<1x128xf32, #tpu.memory_space<vmem>>, %arg5: memref<1x32xf32, #tpu.memory_space<vmem>>, %arg6: memref<32x32xf32, #tpu.memory_space<vmem>>, %arg7: memref<128x128xf32, #tpu.memory_space<vmem>>) attributes {dimension_semantics = [#tpu.dimension_semantics<parallel>], iteration_bounds = array<i64: 2>, scalar_prefetch = 0 : i64, scratch_operands = 1 : i64, tpu.core_type = #tpu.core_type<tc>, window_params = [{transform_indices = @transform_0, window_bounds = array<i64: 4, 32, 32>}, {pipeline_mode = #tpu.pipeline_mode<synchronous>, transform_indices = @transform_1, window_bounds = array<i64: 32, 128>}, {pipeline_mode = #tpu.pipeline_mode<synchronous>, transform_indices = @transform_2, window_bounds = array<i64: 32, 128>}, {pipeline_mode = #tpu.pipeline_mode<synchronous>, transform_indices = @transform_3, window_bounds = array<i64: 1, 128>}, {pipeline_mode = #tpu.pipeline_mode<synchronous>, transform_indices = @transform_4, window_bounds = array<i64: 1, 32>}, {transform_indices = @transform_5, window_bounds = array<i64: 32, 32>}]} {
    %c0 = arith.constant 0 : index
    %c0_0 = arith.constant 0 : index
    %c0_1 = arith.constant 0 : index
    %0 = vector.load %arg1[%c0, %c0_0, %c0_1] : memref<4x32x32xbf16, #tpu.memory_space<vmem>>, vector<4x32x32xbf16>
    %1 = vector.shape_cast %0 : vector<4x32x32xbf16> to vector<128x32xbf16>
    %c0_2 = arith.constant 0 : index
    %c0_3 = arith.constant 0 : index
    %2 = vector.load %arg2[%c0_2, %c0_3] : memref<32x128xbf16, #tpu.memory_space<vmem>>, vector<32x128xbf16>
    %cst = arith.constant dense<0.000000e+00> : vector<128x128xf32>
    %3 = tpu.matmul %1, %2, %cst {dimension_numbers = #tpu.dot_dimension_numbers<[1], [0], [0], [1], [0, 0, 1, 1], [], []>} : vector<128x32xbf16>, vector<32x128xbf16>, vector<128x128xf32> -> vector<128x128xf32>
    %c0_4 = arith.constant 0 : index
    %c0_5 = arith.constant 0 : index
    %4 = vector.load %arg4[%c0_4, %c0_5] : memref<1x128xf32, #tpu.memory_space<vmem>>, vector<1x128xf32>
    %5 = vector.broadcast %4 : vector<1x128xf32> to vector<128x128xf32>
    %6 = arith.addf %3, %5 : vector<128x128xf32>
    %c0_6 = arith.constant 0 : index
    %c0_7 = arith.constant 0 : index
    %7 = vector.load %arg7[%c0_6, %c0_7] : memref<128x128xf32, #tpu.memory_space<vmem>>, vector<128x128xf32>
    tpu.vector_store %arg7[%c0_6, %c0_7], %6 {strides = array<i32>} : memref<128x128xf32, #tpu.memory_space<vmem>>, vector<128x128xf32>,
    %c0_8 = arith.constant 0 : index
    %c0_9 = arith.constant 0 : index
    %8 = vector.load %arg3[%c0_8, %c0_9] : memref<32x128xbf16, #tpu.memory_space<vmem>>, vector<32x128xbf16>
    %c0_10 = arith.constant 0 : index
    %c0_11 = arith.constant 0 : index
    %9 = vector.load %arg5[%c0_10, %c0_11] : memref<1x32xf32, #tpu.memory_space<vmem>>, vector<1x32xf32>
    %10 = vector.shape_cast %9 : vector<1x32xf32> to vector<1x32xf32>
    %11 = vector.broadcast %10 : vector<1x32xf32> to vector<32x32xf32>
    %cst_12 = arith.constant 0.000000e+00 : f32
    %12 = vector.broadcast %cst_12 : f32 to vector<32x32xf32>
    %cst_13 = arith.constant 0.000000e+00 : f32
    %13 = vector.broadcast %cst_13 : f32 to vector<32x32xf32>
    %cst_14 = arith.constant 0xFF800000 : f32
    %14 = vector.broadcast %cst_14 : f32 to vector<32x1xf32>
    %cst_15 = arith.constant 0.000000e+00 : f32
    %15 = vector.broadcast %cst_15 : f32 to vector<32x1xf32>
    %cst_16 = arith.constant 0.000000e+00 : f32
    %16 = vector.broadcast %cst_16 : f32 to vector<32x32xf32>
    %c0_17 = arith.constant 0 : index
    %c0_18 = arith.constant 0 : index
    %17 = vector.load %arg7[%c0_17, %c0_18] : memref<128x128xf32, #tpu.memory_space<vmem>>, vector<32x128xf32>
    %18 = arith.truncf %12 : vector<32x32xf32> to vector<32x32xbf16>
    %cst_19 = arith.constant dense<0.000000e+00> : vector<32x128xf32>
    %19 = tpu.matmul %18, %8, %cst_19 {dimension_numbers = #tpu.dot_dimension_numbers<[1], [0], [0], [1], [0, 0, 1, 1], [], []>} : vector<32x32xbf16>, vector<32x128xbf16>, vector<32x128xf32> -> vector<32x128xf32>
    %20 = arith.addf %17, %19 : vector<32x128xf32>
    %21 = vector.extract_strided_slice %20 {offsets = [0, 0], sizes = [32, 32], strides = [1, 1]} : vector<32x128xf32> to vector<32x32xf32>
    %22 = arith.negf %21 : vector<32x32xf32>
    %23 = math.exp %22 : vector<32x32xf32>
    %cst_20 = arith.constant 1.000000e+00 : f32
    %24 = vector.broadcast %cst_20 : f32 to vector<32x32xf32>
    %25 = arith.addf %24, %23 : vector<32x32xf32>
    %26 = arith.divf %24, %25 : vector<32x32xf32>
    %27 = vector.extract_strided_slice %20 {offsets = [0, 32], sizes = [32, 32], strides = [1, 1]} : vector<32x128xf32> to vector<32x32xf32>
    %28 = arith.negf %27 : vector<32x32xf32>
    %29 = math.exp %28 : vector<32x32xf32>
    %cst_21 = arith.constant 1.000000e+00 : f32
    %30 = vector.broadcast %cst_21 : f32 to vector<32x32xf32>
    %31 = arith.addf %30, %29 : vector<32x32xf32>
    %32 = arith.divf %30, %31 : vector<32x32xf32>
    %33 = vector.extract_strided_slice %20 {offsets = [0, 64], sizes = [32, 32], strides = [1, 1]} : vector<32x128xf32> to vector<32x32xf32>
    %34 = math.tanh %33 : vector<32x32xf32>
    %35 = vector.extract_strided_slice %20 {offsets = [0, 96], sizes = [32, 32], strides = [1, 1]} : vector<32x128xf32> to vector<32x32xf32>
    %36 = arith.negf %35 : vector<32x32xf32>
    %37 = math.exp %36 : vector<32x32xf32>
    %cst_22 = arith.constant 1.000000e+00 : f32
    %38 = vector.broadcast %cst_22 : f32 to vector<32x32xf32>
    %39 = arith.addf %38, %37 : vector<32x32xf32>
    %40 = arith.divf %38, %39 : vector<32x32xf32>
    %41 = arith.mulf %32, %13 : vector<32x32xf32>
    %42 = arith.mulf %26, %34 : vector<32x32xf32>
    %43 = arith.addf %41, %42 : vector<32x32xf32>
    %44 = math.tanh %43 : vector<32x32xf32>
    %45 = arith.mulf %40, %44 : vector<32x32xf32>
    %46 = arith.mulf %45, %11 : vector<32x32xf32>
    %cst_23 = arith.constant dense<0.000000e+00> : vector<32xf32>
    %47 = vector.multi_reduction <add>, %46, %cst_23 [1] : vector<32x32xf32> to vector<32xf32>
    %48 = vector.shape_cast %47 : vector<32xf32> to vector<32x1xf32>
    %49 = arith.maximumf %14, %48 : vector<32x1xf32>
    %50 = arith.subf %14, %49 : vector<32x1xf32>
    %51 = math.exp %50 : vector<32x1xf32>
    %52 = arith.subf %48, %49 : vector<32x1xf32>
    %53 = math.exp %52 : vector<32x1xf32>
    %54 = arith.mulf %51, %15 : vector<32x1xf32>
    %55 = arith.addf %54, %53 : vector<32x1xf32>
    %56 = vector.broadcast %51 : vector<32x1xf32> to vector<32x32xf32>
    %57 = arith.mulf %56, %16 : vector<32x32xf32>
    %58 = vector.broadcast %53 : vector<32x1xf32> to vector<32x32xf32>
    %59 = arith.mulf %58, %45 : vector<32x32xf32>
    %60 = arith.addf %57, %59 : vector<32x32xf32>
    %c32 = arith.constant 32 : index
    %c0_24 = arith.constant 0 : index
    %61 = vector.load %arg7[%c32, %c0_24] : memref<128x128xf32, #tpu.memory_space<vmem>>, vector<32x128xf32>
    %62 = arith.truncf %45 : vector<32x32xf32> to vector<32x32xbf16>
    %cst_25 = arith.constant dense<0.000000e+00> : vector<32x128xf32>
    %63 = tpu.matmul %62, %8, %cst_25 {dimension_numbers = #tpu.dot_dimension_numbers<[1], [0], [0], [1], [0, 0, 1, 1], [], []>} : vector<32x32xbf16>, vector<32x128xbf16>, vector<32x128xf32> -> vector<32x128xf32>
    %64 = arith.addf %61, %63 : vector<32x128xf32>
    %65 = vector.extract_strided_slice %64 {offsets = [0, 0], sizes = [32, 32], strides = [1, 1]} : vector<32x128xf32> to vector<32x32xf32>
    %66 = arith.negf %65 : vector<32x32xf32>
    %67 = math.exp %66 : vector<32x32xf32>
    %cst_26 = arith.constant 1.000000e+00 : f32
    %68 = vector.broadcast %cst_26 : f32 to vector<32x32xf32>
    %69 = arith.addf %68, %67 : vector<32x32xf32>
    %70 = arith.divf %68, %69 : vector<32x32xf32>
    %71 = vector.extract_strided_slice %64 {offsets = [0, 32], sizes = [32, 32], strides = [1, 1]} : vector<32x128xf32> to vector<32x32xf32>
    %72 = arith.negf %71 : vector<32x32xf32>
    %73 = math.exp %72 : vector<32x32xf32>
    %cst_27 = arith.constant 1.000000e+00 : f32
    %74 = vector.broadcast %cst_27 : f32 to vector<32x32xf32>
    %75 = arith.addf %74, %73 : vector<32x32xf32>
    %76 = arith.divf %74, %75 : vector<32x32xf32>
    %77 = vector.extract_strided_slice %64 {offsets = [0, 64], sizes = [32, 32], strides = [1, 1]} : vector<32x128xf32> to vector<32x32xf32>
    %78 = math.tanh %77 : vector<32x32xf32>
    %79 = vector.extract_strided_slice %64 {offsets = [0, 96], sizes = [32, 32], strides = [1, 1]} : vector<32x128xf32> to vector<32x32xf32>
    %80 = arith.negf %79 : vector<32x32xf32>
    %81 = math.exp %80 : vector<32x32xf32>
    %cst_28 = arith.constant 1.000000e+00 : f32
    %82 = vector.broadcast %cst_28 : f32 to vector<32x32xf32>
    %83 = arith.addf %82, %81 : vector<32x32xf32>
    %84 = arith.divf %82, %83 : vector<32x32xf32>
    %85 = arith.mulf %76, %43 : vector<32x32xf32>
    %86 = arith.mulf %70, %78 : vector<32x32xf32>
    %87 = arith.addf %85, %86 : vector<32x32xf32>
    %88 = math.tanh %87 : vector<32x32xf32>
    %89 = arith.mulf %84, %88 : vector<32x32xf32>
    %90 = arith.mulf %89, %11 : vector<32x32xf32>
    %cst_29 = arith.constant dense<0.000000e+00> : vector<32xf32>
    %91 = vector.multi_reduction <add>, %90, %cst_29 [1] : vector<32x32xf32> to vector<32xf32>
    %92 = vector.shape_cast %91 : vector<32xf32> to vector<32x1xf32>
    %93 = arith.maximumf %49, %92 : vector<32x1xf32>
    %94 = arith.subf %49, %93 : vector<32x1xf32>
    %95 = math.exp %94 : vector<32x1xf32>
    %96 = arith.subf %92, %93 : vector<32x1xf32>
    %97 = math.exp %96 : vector<32x1xf32>
    %98 = arith.mulf %95, %55 : vector<32x1xf32>
    %99 = arith.addf %98, %97 : vector<32x1xf32>
    %100 = vector.broadcast %95 : vector<32x1xf32> to vector<32x32xf32>
    %101 = arith.mulf %100, %60 : vector<32x32xf32>
    %102 = vector.broadcast %97 : vector<32x1xf32> to vector<32x32xf32>
    %103 = arith.mulf %102, %89 : vector<32x32xf32>
    %104 = arith.addf %101, %103 : vector<32x32xf32>
    %c64 = arith.constant 64 : index
    %c0_30 = arith.constant 0 : index
    %105 = vector.load %arg7[%c64, %c0_30] : memref<128x128xf32, #tpu.memory_space<vmem>>, vector<32x128xf32>
    %106 = arith.truncf %89 : vector<32x32xf32> to vector<32x32xbf16>
    %cst_31 = arith.constant dense<0.000000e+00> : vector<32x128xf32>
    %107 = tpu.matmul %106, %8, %cst_31 {dimension_numbers = #tpu.dot_dimension_numbers<[1], [0], [0], [1], [0, 0, 1, 1], [], []>} : vector<32x32xbf16>, vector<32x128xbf16>, vector<32x128xf32> -> vector<32x128xf32>
    %108 = arith.addf %105, %107 : vector<32x128xf32>
    %109 = vector.extract_strided_slice %108 {offsets = [0, 0], sizes = [32, 32], strides = [1, 1]} : vector<32x128xf32> to vector<32x32xf32>
    %110 = arith.negf %109 : vector<32x32xf32>
    %111 = math.exp %110 : vector<32x32xf32>
    %cst_32 = arith.constant 1.000000e+00 : f32
    %112 = vector.broadcast %cst_32 : f32 to vector<32x32xf32>
    %113 = arith.addf %112, %111 : vector<32x32xf32>
    %114 = arith.divf %112, %113 : vector<32x32xf32>
    %115 = vector.extract_strided_slice %108 {offsets = [0, 32], sizes = [32, 32], strides = [1, 1]} : vector<32x128xf32> to vector<32x32xf32>
    %116 = arith.negf %115 : vector<32x32xf32>
    %117 = math.exp %116 : vector<32x32xf32>
    %cst_33 = arith.constant 1.000000e+00 : f32
    %118 = vector.broadcast %cst_33 : f32 to vector<32x32xf32>
    %119 = arith.addf %118, %117 : vector<32x32xf32>
    %120 = arith.divf %118, %119 : vector<32x32xf32>
    %121 = vector.extract_strided_slice %108 {offsets = [0, 64], sizes = [32, 32], strides = [1, 1]} : vector<32x128xf32> to vector<32x32xf32>
    %122 = math.tanh %121 : vector<32x32xf32>
    %123 = vector.extract_strided_slice %108 {offsets = [0, 96], sizes = [32, 32], strides = [1, 1]} : vector<32x128xf32> to vector<32x32xf32>
    %124 = arith.negf %123 : vector<32x32xf32>
    %125 = math.exp %124 : vector<32x32xf32>
    %cst_34 = arith.constant 1.000000e+00 : f32
    %126 = vector.broadcast %cst_34 : f32 to vector<32x32xf32>
    %127 = arith.addf %126, %125 : vector<32x32xf32>
    %128 = arith.divf %126, %127 : vector<32x32xf32>
    %129 = arith.mulf %120, %87 : vector<32x32xf32>
    %130 = arith.mulf %114, %122 : vector<32x32xf32>
    %131 = arith.addf %129, %130 : vector<32x32xf32>
    %132 = math.tanh %131 : vector<32x32xf32>
    %133 = arith.mulf %128, %132 : vector<32x32xf32>
    %134 = arith.mulf %133, %11 : vector<32x32xf32>
    %cst_35 = arith.constant dense<0.000000e+00> : vector<32xf32>
    %135 = vector.multi_reduction <add>, %134, %cst_35 [1] : vector<32x32xf32> to vector<32xf32>
    %136 = vector.shape_cast %135 : vector<32xf32> to vector<32x1xf32>
    %137 = arith.maximumf %93, %136 : vector<32x1xf32>
    %138 = arith.subf %93, %137 : vector<32x1xf32>
    %139 = math.exp %138 : vector<32x1xf32>
    %140 = arith.subf %136, %137 : vector<32x1xf32>
    %141 = math.exp %140 : vector<32x1xf32>
    %142 = arith.mulf %139, %99 : vector<32x1xf32>
    %143 = arith.addf %142, %141 : vector<32x1xf32>
    %144 = vector.broadcast %139 : vector<32x1xf32> to vector<32x32xf32>
    %145 = arith.mulf %144, %104 : vector<32x32xf32>
    %146 = vector.broadcast %141 : vector<32x1xf32> to vector<32x32xf32>
    %147 = arith.mulf %146, %133 : vector<32x32xf32>
    %148 = arith.addf %145, %147 : vector<32x32xf32>
    %c96 = arith.constant 96 : index
    %c0_36 = arith.constant 0 : index
    %149 = vector.load %arg7[%c96, %c0_36] : memref<128x128xf32, #tpu.memory_space<vmem>>, vector<32x128xf32>
    %150 = arith.truncf %133 : vector<32x32xf32> to vector<32x32xbf16>
    %cst_37 = arith.constant dense<0.000000e+00> : vector<32x128xf32>
    %151 = tpu.matmul %150, %8, %cst_37 {dimension_numbers = #tpu.dot_dimension_numbers<[1], [0], [0], [1], [0, 0, 1, 1], [], []>} : vector<32x32xbf16>, vector<32x128xbf16>, vector<32x128xf32> -> vector<32x128xf32>
    %152 = arith.addf %149, %151 : vector<32x128xf32>
    %153 = vector.extract_strided_slice %152 {offsets = [0, 0], sizes = [32, 32], strides = [1, 1]} : vector<32x128xf32> to vector<32x32xf32>
    %154 = arith.negf %153 : vector<32x32xf32>
    %155 = math.exp %154 : vector<32x32xf32>
    %cst_38 = arith.constant 1.000000e+00 : f32
    %156 = vector.broadcast %cst_38 : f32 to vector<32x32xf32>
    %157 = arith.addf %156, %155 : vector<32x32xf32>
    %158 = arith.divf %156, %157 : vector<32x32xf32>
    %159 = vector.extract_strided_slice %152 {offsets = [0, 32], sizes = [32, 32], strides = [1, 1]} : vector<32x128xf32> to vector<32x32xf32>
    %160 = arith.negf %159 : vector<32x32xf32>
    %161 = math.exp %160 : vector<32x32xf32>
    %cst_39 = arith.constant 1.000000e+00 : f32
    %162 = vector.broadcast %cst_39 : f32 to vector<32x32xf32>
    %163 = arith.addf %162, %161 : vector<32x32xf32>
    %164 = arith.divf %162, %163 : vector<32x32xf32>
    %165 = vector.extract_strided_slice %152 {offsets = [0, 64], sizes = [32, 32], strides = [1, 1]} : vector<32x128xf32> to vector<32x32xf32>
    %166 = math.tanh %165 : vector<32x32xf32>
    %167 = vector.extract_strided_slice %152 {offsets = [0, 96], sizes = [32, 32], strides = [1, 1]} : vector<32x128xf32> to vector<32x32xf32>
    %168 = arith.negf %167 : vector<32x32xf32>
    %169 = math.exp %168 : vector<32x32xf32>
    %cst_40 = arith.constant 1.000000e+00 : f32
    %170 = vector.broadcast %cst_40 : f32 to vector<32x32xf32>
    %171 = arith.addf %170, %169 : vector<32x32xf32>
    %172 = arith.divf %170, %171 : vector<32x32xf32>
    %173 = arith.mulf %164, %131 : vector<32x32xf32>
    %174 = arith.mulf %158, %166 : vector<32x32xf32>
    %175 = arith.addf %173, %174 : vector<32x32xf32>
    %176 = math.tanh %175 : vector<32x32xf32>
    %177 = arith.mulf %172, %176 : vector<32x32xf32>
    %178 = arith.mulf %177, %11 : vector<32x32xf32>
    %cst_41 = arith.constant dense<0.000000e+00> : vector<32xf32>
    %179 = vector.multi_reduction <add>, %178, %cst_41 [1] : vector<32x32xf32> to vector<32xf32>
    %180 = vector.shape_cast %179 : vector<32xf32> to vector<32x1xf32>
    %181 = arith.maximumf %137, %180 : vector<32x1xf32>
    %182 = arith.subf %137, %181 : vector<32x1xf32>
    %183 = math.exp %182 : vector<32x1xf32>
    %184 = arith.subf %180, %181 : vector<32x1xf32>
    %185 = math.exp %184 : vector<32x1xf32>
    %186 = arith.mulf %183, %143 : vector<32x1xf32>
    %187 = arith.addf %186, %185 : vector<32x1xf32>
    %188 = vector.broadcast %183 : vector<32x1xf32> to vector<32x32xf32>
    %189 = arith.mulf %188, %148 : vector<32x32xf32>
    %190 = vector.broadcast %185 : vector<32x1xf32> to vector<32x32xf32>
    %191 = arith.mulf %190, %177 : vector<32x32xf32>
    %192 = arith.addf %189, %191 : vector<32x32xf32>
    %193 = tpu.reciprocal %187 {approx = true} : vector<32x1xf32> -> vector<32x1xf32>
    %194 = vector.broadcast %193 : vector<32x1xf32> to vector<32x32xf32>
    %195 = arith.mulf %192, %194 : vector<32x32xf32>
    %c0_42 = arith.constant 0 : index
    %c0_43 = arith.constant 0 : index
    %196 = vector.load %arg6[%c0_42, %c0_43] : memref<32x32xf32, #tpu.memory_space<vmem>>, vector<32x32xf32>
    tpu.vector_store %arg6[%c0_42, %c0_43], %195 {strides = array<i32>} : memref<32x32xf32, #tpu.memory_space<vmem>>, vector<32x32xf32>,
    return
  }
  func.func @transform_0(%arg0: i32) -> (i32, i32, i32) {
    %c0_i32 = arith.constant 0 : i32
    %c0_i32_0 = arith.constant 0 : i32
    %c0_i32_1 = arith.constant 0 : i32
    return %c0_i32, %arg0, %c0_i32_0 : i32, i32, i32
  }
  func.func @transform_1(%arg0: i32) -> (i32, i32) {
    %c0_i32 = arith.constant 0 : i32
    %c0_i32_0 = arith.constant 0 : i32
    %c0_i32_1 = arith.constant 0 : i32
    return %c0_i32, %c0_i32_0 : i32, i32
  }
  func.func @transform_2(%arg0: i32) -> (i32, i32) {
    %c0_i32 = arith.constant 0 : i32
    %c0_i32_0 = arith.constant 0 : i32
    %c0_i32_1 = arith.constant 0 : i32
    return %c0_i32, %c0_i32_0 : i32, i32
  }
  func.func @transform_3(%arg0: i32) -> (i32, i32) {
    %c0_i32 = arith.constant 0 : i32
    %c0_i32_0 = arith.constant 0 : i32
    %c0_i32_1 = arith.constant 0 : i32
    return %c0_i32, %c0_i32_0 : i32, i32
  }
  func.func @transform_4(%arg0: i32) -> (i32, i32) {
    %c0_i32 = arith.constant 0 : i32
    %c0_i32_0 = arith.constant 0 : i32
    %c0_i32_1 = arith.constant 0 : i32
    return %c0_i32, %c0_i32_0 : i32, i32
  }
  func.func @transform_5(%arg0: i32) -> (i32, i32) {
    %c0_i32 = arith.constant 0 : i32
    %c0_i32_0 = arith.constant 0 : i32
    return %arg0, %c0_i32 : i32, i32
  }
}

</mosaic_0001>

<llo_original>
// kernel: tpu_custom_call.1
$region0: #{tpu_custom_call.1}
  #allocation0 [shape = 'u32[]', space=smem, size = 0x4, offset = 0x4, fixed_abs, tag = 'smem constant byte address 0x4 - core index']
  #allocation1 [shape = 'u32[72,128]{1,0:T(1,128)}', space=vmem, size = 0x9000, scoped, tag = 'internal scratch']
  #allocation2 [shape = 'f32[128,128]{1,0:T(8,128)}', space=vmem, size = 0x10000, scoped, tag = 'scratch operand']
  %s0 = inlined_call_operand.vmem [shape: bf16[4,64,32], index: 0, kind: input, shape index: {}]
  %s1 = inlined_call_operand.vmem [shape: bf16[32,128], index: 1, kind: input, shape index: {}]
  %s2 = inlined_call_operand.vmem [shape: bf16[32,128], index: 2, kind: input, shape index: {}]
  %s3 = inlined_call_operand.vmem [shape: f32[1,128], index: 3, kind: input, shape index: {}]
  %s4 = inlined_call_operand.vmem [shape: f32[1,32], index: 4, kind: input, shape index: {}]
  %s5 = inlined_call_operand.vmem [shape: f32[64,32], index: 5, kind: output, shape index: {}]
  %s6 = sld [smem:[#allocation0]]
  $region94: #{tpu_custom_call.1} parent=0
    _
  %s8 = ssub.s32 1, %s6
  %s9 = scalar_select 0, %s8, %s6
  $region1: #{tpu_custom_call.1} parent=0
    #allocation3 [shape = 'u8[65536]{0}', space=vmem, size = 0x10000, scoped, tag = 'input window, operand 0']
    loop: start=0, step=1, limit=4
    $region2: #{tpu_custom_call.1} parent=1 // loop_pre_header
      _
    $region3: #{tpu_custom_call.1} parent=1 // loop_header
      %s11 = sphi 0, %s15
      %p12 = scmp.ge.s32.totalorder %s11, 4
      %s21 = sphi 0, %s23
      %s24 = sphi 0, %s21
      %s25 = sphi 0, %s24
      %s41 = sphi 0, %s25
      %s45 = sphi 0, %s45
      %s47 = sphi 0, %s45
      %s48 = sphi 0, %s47
      %s62 = sphi 0, %s48
      %s66 = sphi 0, %s66
      %s68 = sphi 0, %s66
      %s69 = sphi 0, %s68
      %s83 = sphi 0, %s69
      %s87 = sphi 0, %s87
      %s89 = sphi 0, %s87
      %s90 = sphi 0, %s89
      %s104 = sphi 0, %s90
      %s108 = sphi 0, %s108
      %s110 = sphi 0, %s108
      %s111 = sphi 0, %s110
      %s125 = sphi 0, %s111
      %s131 = sphi 0, %s133
      %s134 = sphi 0, %s131
      %s135 = sphi 0, %s134
      %s151 = sphi 0, %s135
    $region4: #{tpu_custom_call.1} parent=1 // loop_header_branch
      %14 = sbr.rel (%p12) target = $region8
    $region5: #{tpu_custom_call.1} parent=1 // loop_body
      %s16 = ssub.s32 %s11, 1
      %s17 = ssub.s32 %s11, 2
      %s18 = sadd.s32 %s11, 1
      %s19 = ssub.s32 %s11, %s18
      %p20 = scmp.eq.s32.totalorder %s19, 0
      %s22 = sadd.s32 %s21, 1
      %s23 = scalar_select %p20, %s21, %s22
      %p26 = pneg %p20
      %p27 = scmp.eq.s32.totalorder %s11, 1
      %p28 = por %p26, %p27
      %p29 = scmp.ne.s32.totalorder %s21, %s24
      %p30 = scmp.eq.s32.totalorder %s11, 0
      %p31 = por %p29, %p30
      %p32 = scmp.ne.s32.totalorder %s21, %s24
      %p33 = scmp.eq.s32.totalorder %s16, 1
      %p34 = por %p32, %p33
      %p35 = scmp.ne.s32.totalorder %s24, %s25
      %p36 = scmp.eq.s32.totalorder %s16, 0
      %p37 = por %p35, %p36
      %p38 = scmp.ne.s32.totalorder %s24, %s25
      %p39 = scmp.eq.s32.totalorder %s17, 1
      %p40 = por %p38, %p39
      %p42 = scmp.ne.s32.totalorder %s25, %s41
      %p43 = scmp.eq.s32.totalorder %s17, 0
      %p44 = por %p42, %p43
      %s46 = sadd.s32 %s45, 1
      %p49 = scmp.eq.s32.totalorder %s11, 1
      %p50 = scmp.ne.s32.totalorder %s45, %s47
      %p51 = scmp.eq.s32.totalorder %s11, 0
      %p52 = por %p50, %p51
      %p53 = scmp.ne.s32.totalorder %s45, %s47
      %p54 = scmp.eq.s32.totalorder %s16, 1
      %p55 = por %p53, %p54
      %p56 = scmp.ne.s32.totalorder %s47, %s48
      %p57 = scmp.eq.s32.totalorder %s16, 0
      %p58 = por %p56, %p57
      %p59 = scmp.ne.s32.totalorder %s47, %s48
      %p60 = scmp.eq.s32.totalorder %s17, 1
      %p61 = por %p59, %p60
      %p63 = scmp.ne.s32.totalorder %s48, %s62
      %p64 = scmp.eq.s32.totalorder %s17, 0
      %p65 = por %p63, %p64
      %s67 = sadd.s32 %s66, 1
      %p70 = scmp.eq.s32.totalorder %s11, 1
      %p71 = scmp.ne.s32.totalorder %s66, %s68
      %p72 = scmp.eq.s32.totalorder %s11, 0
      %p73 = por %p71, %p72
      %p74 = scmp.ne.s32.totalorder %s66, %s68
      %p75 = scmp.eq.s32.totalorder %s16, 1
      %p76 = por %p74, %p75
      %p77 = scmp.ne.s32.totalorder %s68, %s69
      %p78 = scmp.eq.s32.totalorder %s16, 0
      %p79 = por %p77, %p78
      %p80 = scmp.ne.s32.totalorder %s68, %s69
      %p81 = scmp.eq.s32.totalorder %s17, 1
      %p82 = por %p80, %p81
      %p84 = scmp.ne.s32.totalorder %s69, %s83
      %p85 = scmp.eq.s32.totalorder %s17, 0
      %p86 = por %p84, %p85
      %s88 = sadd.s32 %s87, 1
      %p91 = scmp.eq.s32.totalorder %s11, 1
      %p92 = scmp.ne.s32.totalorder %s87, %s89
      %p93 = scmp.eq.s32.totalorder %s11, 0
      %p94 = por %p92, %p93
      %p95 = scmp.ne.s32.totalorder %s87, %s89
      %p96 = scmp.eq.s32.totalorder %s16, 1
      %p97 = por %p95, %p96
      %p98 = scmp.ne.s32.totalorder %s89, %s90
      %p99 = scmp.eq.s32.totalorder %s16, 0
      %p100 = por %p98, %p99
      %p101 = scmp.ne.s32.totalorder %s89, %s90
      %p102 = scmp.eq.s32.totalorder %s17, 1
      %p103 = por %p101, %p102
      %p105 = scmp.ne.s32.totalorder %s90, %s104
      %p106 = scmp.eq.s32.totalorder %s17, 0
      %p107 = por %p105, %p106
      %s109 = sadd.s32 %s108, 1
      %p112 = scmp.eq.s32.totalorder %s11, 1
      %p113 = scmp.ne.s32.totalorder %s108, %s110
      %p114 = scmp.eq.s32.totalorder %s11, 0
      %p115 = por %p113, %p114
      %p116 = scmp.ne.s32.totalorder %s108, %s110
      %p117 = scmp.eq.s32.totalorder %s16, 1
      %p118 = por %p116, %p117
      %p119 = scmp.ne.s32.totalorder %s110, %s111
      %p120 = scmp.eq.s32.totalorder %s16, 0
      %p121 = por %p119, %p120
      %p122 = scmp.ne.s32.totalorder %s110, %s111
      %p123 = scmp.eq.s32.totalorder %s17, 1
      %p124 = por %p122, %p123
      %p126 = scmp.ne.s32.totalorder %s111, %s125
      %p127 = scmp.eq.s32.totalorder %s17, 0
      %p128 = por %p126, %p127
      %s129 = ssub.s32 %s11, %s18
      %p130 = scmp.eq.s32.totalorder %s129, 0
      %s132 = sadd.s32 %s131, 1
      %s133 = scalar_select %p130, %s131, %s132
      %p136 = pneg %p130
      %p137 = scmp.eq.s32.totalorder %s11, 1
      %p138 = por %p136, %p137
      %p139 = scmp.ne.s32.totalorder %s131, %s134
      %p140 = scmp.eq.s32.totalorder %s11, 0
      %p141 = por %p139, %p140
      %p142 = scmp.ne.s32.totalorder %s131, %s134
      %p143 = scmp.eq.s32.totalorder %s16, 1
      %p144 = por %p142, %p143
      %p145 = scmp.ne.s32.totalorder %s134, %s135
      %p146 = scmp.eq.s32.totalorder %s16, 0
      %p147 = por %p145, %p146
      %p148 = scmp.ne.s32.totalorder %s134, %s135
      %p149 = scmp.eq.s32.totalorder %s17, 1
      %p150 = por %p148, %p149
      %p152 = scmp.ne.s32.totalorder %s135, %s151
      %p153 = scmp.eq.s32.totalorder %s17, 0
      %p154 = por %p152, %p153
      %p155 = scmp.le.s32.totalorder 1, %s11
      %p156 = scmp.lt.s32.totalorder %s11, 3
      %p157 = pnand %p155, %p156
      %p158 = pneg %p157
      // Predicated region
      $region9: #{tpu_custom_call.1} parent=5 // pred_check
        _
      $region10: #{tpu_custom_call.1} parent=5 // pred_check_branch
        %160 = sbr.rel (%p157) target = $region12
      $region11: #{tpu_custom_call.1} parent=5 // pred_region
        %s161 = ssub.s32 %s11, 1
        // Predicated region
        $region13: #{tpu_custom_call.1} parent=11 // pred_check
          %p162 = pneg %p58
        $region14: #{tpu_custom_call.1} parent=11 // pred_check_branch
          %164 = sbr.rel (%p162) target = $region16
        $region15: #{tpu_custom_call.1} parent=11 // pred_region
          _
        $region16: #{tpu_custom_call.1} parent=11 // pred_fallthru
          _
        // Predicated region
        $region17: #{tpu_custom_call.1} parent=11 // pred_check
          %p165 = pneg %p79
        $region18: #{tpu_custom_call.1} parent=11 // pred_check_branch
          %167 = sbr.rel (%p165) target = $region20
        $region19: #{tpu_custom_call.1} parent=11 // pred_region
          _
        $region20: #{tpu_custom_call.1} parent=11 // pred_fallthru
          _
        // Predicated region
        $region21: #{tpu_custom_call.1} parent=11 // pred_check
          %p168 = pneg %p100
        $region22: #{tpu_custom_call.1} parent=11 // pred_check_branch
          %170 = sbr.rel (%p168) target = $region24
        $region23: #{tpu_custom_call.1} parent=11 // pred_region
          _
        $region24: #{tpu_custom_call.1} parent=11 // pred_fallthru
          _
        // Predicated region
        $region25: #{tpu_custom_call.1} parent=11 // pred_check
          %p171 = pneg %p121
        $region26: #{tpu_custom_call.1} parent=11 // pred_check_branch
          %173 = sbr.rel (%p171) target = $region28
        $region27: #{tpu_custom_call.1} parent=11 // pred_region
          _
        $region28: #{tpu_custom_call.1} parent=11 // pred_fallthru
          _
      $region12: #{tpu_custom_call.1} parent=5 // pred_fallthru
        _
      %p174 = scmp.lt.s32.totalorder %s11, 2
      // Predicated region
      $region29: #{tpu_custom_call.1} parent=5 // pred_check
        %p175 = pneg %p174
      $region30: #{tpu_custom_call.1} parent=5 // pred_check_branch
        %177 = sbr.rel (%p175) target = $region32
      $region31: #{tpu_custom_call.1} parent=5 // pred_region
        // Predicated region
        $region33: #{tpu_custom_call.1} parent=31 // pred_check
          %p178 = pneg %p31
        $region34: #{tpu_custom_call.1} parent=31 // pred_check_branch
          %180 = sbr.rel (%p178) target = $region36
        $region35: #{tpu_custom_call.1} parent=31 // pred_region
          %s181 = sand.u32 %s21, 1
          %s182 = sand.u32 %s21, 1
          %s183 = smul.addr %s182, 64
          %s184 = scalar_lea.vmem [#allocation3], %s183
          %s185 = smul.u32 4, %s11
          %s186 = smul.addr %s185, 4
          %s187 = scalar_lea.vmem %s0, %s186
          // Predicated region
          $region37: #{tpu_custom_call.1} parent=35 // pred_check
            _
          $region38: #{tpu_custom_call.1} parent=35 // pred_check_branch
            %189 = sbr.rel (0) target = $region40
          $region39: #{tpu_custom_call.1} parent=35 // pred_region
            // Predicated region
            $region41: #{tpu_custom_call.1} parent=39 // pred_check
              _
            $region42: #{tpu_custom_call.1} parent=39 // pred_check_branch
              %191 = sbr.rel target = $region44
            $region43: #{tpu_custom_call.1} parent=39 // pred_region
              // Predicated region
              $region56: #{tpu_custom_call.1} parent=43 // pred_check
                _
              $region57: #{tpu_custom_call.1} parent=43 // pred_check_branch
                %237 = sbr.rel (0) target = $region59
              $region58: #{tpu_custom_call.1} parent=43 // pred_region
                loop: start=0, step=1, limit=1
                $region60: #{tpu_custom_call.1} parent=58 // loop_pre_header
                  _
                $region61: #{tpu_custom_call.1} parent=58 // loop_header
                  %s239 = sphi 0, %s243
                  %p240 = scmp.ge.s32.totalorder %s239, 1
                  %s244 = sphi %s187, %s187
                  %s245 = sphi %s184, %s184
                $region62: #{tpu_custom_call.1} parent=58 // loop_header_branch
                  %242 = sbr.rel (%p240) target = $region66
                $region63: #{tpu_custom_call.1} parent=58 // loop_body
                  _
                $region64: #{tpu_custom_call.1} parent=58 // loop_footer
                  %s243 = sadd.s32 1, %s239
                $region65: #{tpu_custom_call.1} parent=58 // loop_footer_branch
                  %238 = sbr.rel target = $region61
                $region66: #{tpu_custom_call.1} parent=58 // loop_exit
                  _
                %s247 = ssub.s32 16, 1
                loop: start=0, step=1, limit=1
                $region67: #{tpu_custom_call.1} parent=58 // loop_pre_header
                  _
                $region68: #{tpu_custom_call.1} parent=58 // loop_header
                  %s249 = sphi 0, %s253
                  %p250 = scmp.ge.s32.totalorder %s249, 1
                  %s254 = sphi %s187, %s187
                  %s255 = sphi %s184, %s184
                $region69: #{tpu_custom_call.1} parent=58 // loop_header_branch
                  %252 = sbr.rel (%p250) target = $region73
                $region70: #{tpu_custom_call.1} parent=58 // loop_body
                  %v256 = vld [vmem:[%s254] sm:%s247]
                  %257 = vst [vmem:[%s255] sm:%s247] %v256
                  %v258 = vld [vmem:[%s254 + $0x4] sm:%s247]
                  %259 = vst [vmem:[%s255 + $0x4] sm:%s247] %v258
                  %v260 = vld [vmem:[%s254 + $0x8] sm:%s247]
                  %261 = vst [vmem:[%s255 + $0x8] sm:%s247] %v260
                  %v262 = vld [vmem:[%s254 + $0xc] sm:%s247]
                  %263 = vst [vmem:[%s255 + $0xc] sm:%s247] %v262
                  %v264 = vld [vmem:[%s254 + $0x20] sm:%s247]
                  %265 = vst [vmem:[%s255 + $0x10] sm:%s247] %v264
                  %v266 = vld [vmem:[%s254 + $0x24] sm:%s247]
                  %267 = vst [vmem:[%s255 + $0x14] sm:%s247] %v266
                  %v268 = vld [vmem:[%s254 + $0x28] sm:%s247]
                  %269 = vst [vmem:[%s255 + $0x18] sm:%s247] %v268
                  %v270 = vld [vmem:[%s254 + $0x2c] sm:%s247]
                  %271 = vst [vmem:[%s255 + $0x1c] sm:%s247] %v270
                  %v272 = vld [vmem:[%s254 + $0x40] sm:%s247]
                  %273 = vst [vmem:[%s255 + $0x20] sm:%s247] %v272
                  %v274 = vld [vmem:[%s254 + $0x44] sm:%s247]
                  %275 = vst [vmem:[%s255 + $0x24] sm:%s247] %v274
                  %v276 = vld [vmem:[%s254 + $0x48] sm:%s247]
                  %277 = vst [vmem:[%s255 + $0x28] sm:%s247] %v276
                  %v278 = vld [vmem:[%s254 + $0x4c] sm:%s247]
                  %279 = vst [vmem:[%s255 + $0x2c] sm:%s247] %v278
                  %v280 = vld [vmem:[%s254 + $0x60] sm:%s247]
                  %281 = vst [vmem:[%s255 + $0x30] sm:%s247] %v280
                  %v282 = vld [vmem:[%s254 + $0x64] sm:%s247]
                  %283 = vst [vmem:[%s255 + $0x34] sm:%s247] %v282
                  %v284 = vld [vmem:[%s254 + $0x68] sm:%s247]
                  %285 = vst [vmem:[%s255 + $0x38] sm:%s247] %v284
                  %v286 = vld [vmem:[%s254 + $0x6c] sm:%s247]
                  %287 = vst [vmem:[%s255 + $0x3c] sm:%s247] %v286
                $region71: #{tpu_custom_call.1} parent=58 // loop_footer
                  %s253 = sadd.s32 1, %s249
                $region72: #{tpu_custom_call.1} parent=58 // loop_footer_branch
                  %248 = sbr.rel target = $region68
                $region73: #{tpu_custom_call.1} parent=58 // loop_exit
                  _
              $region59: #{tpu_custom_call.1} parent=43 // pred_fallthru
                _
            $region44: #{tpu_custom_call.1} parent=39 // pred_fallthru
              _
            // Predicated region
            $region45: #{tpu_custom_call.1} parent=39 // pred_check
              _
            $region46: #{tpu_custom_call.1} parent=39 // pred_check_branch
              %193 = sbr.rel (0) target = $region48
            $region47: #{tpu_custom_call.1} parent=39 // pred_region
              %s195 = ssub.s32 16, 1
              loop: start=0, step=1, limit=1
              $region49: #{tpu_custom_call.1} parent=47 // loop_pre_header
                _
              $region50: #{tpu_custom_call.1} parent=47 // loop_header
                %s197 = sphi 0, %s201
                %p198 = scmp.ge.s32.totalorder %s197, 1
                %s202 = sphi %s187, %s187
                %s203 = sphi %s184, %s184
              $region51: #{tpu_custom_call.1} parent=47 // loop_header_branch
                %200 = sbr.rel (%p198) target = $region55
              $region52: #{tpu_custom_call.1} parent=47 // loop_body
                %v204 = vld [vmem:[%s202] sm:%s195]
                %205 = vst [vmem:[%s203] sm:%s195] %v204
                %v206 = vld [vmem:[%s202 + $0x4] sm:%s195]
                %207 = vst [vmem:[%s203 + $0x4] sm:%s195] %v206
                %v208 = vld [vmem:[%s202 + $0x8] sm:%s195]
                %209 = vst [vmem:[%s203 + $0x8] sm:%s195] %v208
                %v210 = vld [vmem:[%s202 + $0xc] sm:%s195]
                %211 = vst [vmem:[%s203 + $0xc] sm:%s195] %v210
                %v212 = vld [vmem:[%s202 + $0x20] sm:%s195]
                %213 = vst [vmem:[%s203 + $0x10] sm:%s195] %v212
                %v214 = vld [vmem:[%s202 + $0x24] sm:%s195]
                %215 = vst [vmem:[%s203 + $0x14] sm:%s195] %v214
                %v216 = vld [vmem:[%s202 + $0x28] sm:%s195]
                %217 = vst [vmem:[%s203 + $0x18] sm:%s195] %v216
                %v218 = vld [vmem:[%s202 + $0x2c] sm:%s195]
                %219 = vst [vmem:[%s203 + $0x1c] sm:%s195] %v218
                %v220 = vld [vmem:[%s202 + $0x40] sm:%s195]
                %221 = vst [vmem:[%s203 + $0x20] sm:%s195] %v220
                %v222 = vld [vmem:[%s202 + $0x44] sm:%s195]
                %223 = vst [vmem:[%s203 + $0x24] sm:%s195] %v222
                %v224 = vld [vmem:[%s202 + $0x48] sm:%s195]
                %225 = vst [vmem:[%s203 + $0x28] sm:%s195] %v224
                %v226 = vld [vmem:[%s202 + $0x4c] sm:%s195]
                %227 = vst [vmem:[%s203 + $0x2c] sm:%s195] %v226
                %v228 = vld [vmem:[%s202 + $0x60] sm:%s195]
                %229 = vst [vmem:[%s203 + $0x30] sm:%s195] %v228
                %v230 = vld [vmem:[%s202 + $0x64] sm:%s195]
                %231 = vst [vmem:[%s203 + $0x34] sm:%s195] %v230
                %v232 = vld [vmem:[%s202 + $0x68] sm:%s195]
                %233 = vst [vmem:[%s203 + $0x38] sm:%s195] %v232
                %v234 = vld [vmem:[%s202 + $0x6c] sm:%s195]
                %235 = vst [vmem:[%s203 + $0x3c] sm:%s195] %v234
              $region53: #{tpu_custom_call.1} parent=47 // loop_footer
                %s201 = sadd.s32 1, %s197
              $region54: #{tpu_custom_call.1} parent=47 // loop_footer_branch
                %196 = sbr.rel target = $region50
              $region55: #{tpu_custom_call.1} parent=47 // loop_exit
                _
            $region48: #{tpu_custom_call.1} parent=39 // pred_fallthru
              _
          $region40: #{tpu_custom_call.1} parent=35 // pred_fallthru
            _
          %288 = vnop
        $region36: #{tpu_custom_call.1} parent=31 // pred_fallthru
          _
      $region32: #{tpu_custom_call.1} parent=5 // pred_fallthru
        _
      %p289 = scmp.le.s32.totalorder 1, %s11
      %p290 = scmp.lt.s32.totalorder %s11, 3
      %p291 = pnand %p289, %p290
      %p292 = pneg %p291
      // Predicated region
      $region74: #{tpu_custom_call.1} parent=5 // pred_check
        _
      $region75: #{tpu_custom_call.1} parent=5 // pred_check_branch
        %294 = sbr.rel (%p291) target = $region77
      $region76: #{tpu_custom_call.1} parent=5 // pred_region
        %s295 = ssub.s32 %s11, 1
        %s296 = sand.u32 %s24, 1
        %s297 = sand.u32 %s24, 1
        %s298 = smul.addr %s297, 64
        %s299 = scalar_lea.vmem [#allocation3], %s298
        // Predicated region
        $region78: #{tpu_custom_call.1} parent=76 // pred_check
          %p300 = pneg %p37
        $region79: #{tpu_custom_call.1} parent=76 // pred_check_branch
          %302 = sbr.rel (%p300) target = $region81
        $region80: #{tpu_custom_call.1} parent=76 // pred_region
          _
        $region81: #{tpu_custom_call.1} parent=76 // pred_fallthru
          _
        %s303 = sand.u32 %s24, 1
        %s304 = sand.u32 %s24, 1
        %s305 = smul.addr %s304, 64
        %s306 = scalar_lea.vmem [#allocation3], %s305
        %p307 = pneg %p37
        %p308 = pneg %p34
        %p309 = pneg %p58
        %p310 = pneg %p55
        %p311 = pneg %p79
        %p312 = pneg %p76
        %p313 = pneg %p100
        %p314 = pneg %p97
        %p315 = pneg %p121
        %p316 = pneg %p118
        %p317 = pneg %p147
        %p318 = pneg %p144
        %s319 = smul.u32 4, %s16
        %p320 = scmp.lt.s32.totalorder %s319, 7
        %s321 = scalar_select %p320, %s319, 7
        %s322 = smul.addr %s321, 8
        %s323 = scalar_lea.vmem %s5, %s322
        %s324 = smul.u32 4, %s16
        %s325 = smul.u32 4, %s16
        %p326 = scmp.lt.s32.totalorder %s325, 7
        %s327 = scalar_select %p326, %s325, 7
        %s328 = smul.addr %s327, 8
        %s329 = scalar_lea.vmem %s5, %s328
        %s330 = smul.u32 4, %s16
        %v332 = vld [vmem:[%s299] sm:$0xf]
        %v333 = vld [vmem:[%s299 + $0x4] sm:$0xf]
        %v334 = vld [vmem:[%s299 + $0x8] sm:$0xf]
        %v335 = vld [vmem:[%s299 + $0xc] sm:$0xf]
        %v336 = vld [vmem:[%s299 + $0x10] sm:$0xf]
        %v337 = vld [vmem:[%s299 + $0x14] sm:$0xf]
        %v338 = vld [vmem:[%s299 + $0x18] sm:$0xf]
        %v339 = vld [vmem:[%s299 + $0x1c] sm:$0xf]
        %v340 = vld [vmem:[%s299 + $0x20] sm:$0xf]
        %v341 = vld [vmem:[%s299 + $0x24] sm:$0xf]
        %v342 = vld [vmem:[%s299 + $0x28] sm:$0xf]
        %v343 = vld [vmem:[%s299 + $0x2c] sm:$0xf]
        %v344 = vld [vmem:[%s299 + $0x30] sm:$0xf]
        %v345 = vld [vmem:[%s299 + $0x34] sm:$0xf]
        %v346 = vld [vmem:[%s299 + $0x38] sm:$0xf]
        %v347 = vld [vmem:[%s299 + $0x3c] sm:$0xf]
        %v348 = vld [vmem:[%s1] sm:$0xf]
        %v349 = vld [vmem:[%s1 + $0x4] sm:$0xf]
        %v350 = vld [vmem:[%s1 + $0x8] sm:$0xf]
        %v351 = vld [vmem:[%s1 + $0xc] sm:$0xf]
        %v352 = vld [vmem:[%s3] sm:$0x1]
        %v354 = vperm.slane %v352, 0
        %v372 = vunpack.c.l.b16 %v332
        %v373 = vunpack.c.l.b16 %v333
        %v374 = vunpack.c.l.b16 %v334
        %v375 = vunpack.c.l.b16 %v335
        %v376 = vunpack.c.l.b16 %v336
        %v377 = vunpack.c.l.b16 %v337
        %v378 = vunpack.c.l.b16 %v338
        %v379 = vunpack.c.l.b16 %v339
        %v380 = vunpack.c.l.b16 %v340
        %v381 = vunpack.c.l.b16 %v341
        %v382 = vunpack.c.l.b16 %v342
        %v383 = vunpack.c.l.b16 %v343
        %v384 = vunpack.c.l.b16 %v344
        %v385 = vunpack.c.l.b16 %v345
        %v386 = vunpack.c.l.b16 %v346
        %v387 = vunpack.c.l.b16 %v347
        %v388 = vpack.c.b16 %v373, %v372
        %v389 = vpack.c.b16 %v375, %v374
        %v390 = vpack.c.b16 %v377, %v376
        %v391 = vpack.c.b16 %v379, %v378
        %v392 = vpack.c.b16 %v381, %v380
        %v393 = vpack.c.b16 %v383, %v382
        %v394 = vpack.c.b16 %v385, %v384
        %v395 = vpack.c.b16 %v387, %v386
        %v400 = vunpack.c.l.b16 %v348
        %v401 = vunpack.c.l.b16 %v349
        %v402 = vunpack.c.l.b16 %v350
        %v403 = vunpack.c.l.b16 %v351
        %v404 = vpack.c.b16 %v401, %v400
        %v405 = vpack.c.b16 %v403, %v402
        %vm408 = vcmask 261120
        %v410 = vsel %vm408, %v388, 0
        %v413 = vsel %vm408, %v389, 0
        %v416 = vsel %vm408, %v390, 0
        %v419 = vsel %vm408, %v391, 0
        %v422 = vsel %vm408, %v392, 0
        %v425 = vsel %vm408, %v393, 0
        %v428 = vsel %vm408, %v394, 0
        %v431 = vsel %vm408, %v395, 0
        %433 = vmatpush.bf16.msra.mxu0 0
        %434 = vmatpush.bf16.msra.mxu0 0
        %435 = vmatpush.bf16.msra.mxu0 0
        %436 = vmatpush.bf16.msra.mxu0 0
        %437 = vmatpush.bf16.msra.mxu0 0
        %438 = vmatpush.bf16.msra.mxu0 0
        %439 = vmatpush.bf16.msra.mxu0 %v405
        %440 = vmatpush.bf16.msra.mxu0 %v404
        %441 = vmatmul.bf16.gmra.mxu0 %v410
        %v442 = vpop.f32.mrf.mxu0
        %v443 = vadd.f32 %v354, %v442
        %v444 = vpop.f32.mrf.mxu0
        %v445 = vadd.f32 %v354, %v444
        %446 = vmatmul.bf16.gmra.mxu0 %v413
        %v447 = vpop.f32.mrf.mxu0
        %v448 = vadd.f32 %v354, %v447
        %v449 = vpop.f32.mrf.mxu0
        %v450 = vadd.f32 %v354, %v449
        %451 = vmatmul.bf16.gmra.mxu0 %v416
        %v452 = vpop.f32.mrf.mxu0
        %v453 = vadd.f32 %v354, %v452
        %v454 = vpop.f32.mrf.mxu0
        %v455 = vadd.f32 %v354, %v454
        %456 = vmatmul.bf16.gmra.mxu0 %v419
        %v457 = vpop.f32.mrf.mxu0
        %v458 = vadd.f32 %v354, %v457
        %v459 = vpop.f32.mrf.mxu0
        %v460 = vadd.f32 %v354, %v459
        %461 = vmatmul.bf16.gmra.mxu0 %v422
        %v462 = vpop.f32.mrf.mxu0
        %v463 = vadd.f32 %v354, %v462
        %v464 = vpop.f32.mrf.mxu0
        %v465 = vadd.f32 %v354, %v464
        %466 = vmatmul.bf16.gmra.mxu0 %v425
        %v467 = vpop.f32.mrf.mxu0
        %v468 = vadd.f32 %v354, %v467
        %v469 = vpop.f32.mrf.mxu0
        %v470 = vadd.f32 %v354, %v469
        %471 = vmatmul.bf16.gmra.mxu0 %v428
        %v472 = vpop.f32.mrf.mxu0
        %v473 = vadd.f32 %v354, %v472
        %v474 = vpop.f32.mrf.mxu0
        %v475 = vadd.f32 %v354, %v474
        %476 = vmatmul.bf16.gmra.mxu0 %v431
        %v477 = vpop.f32.mrf.mxu0
        %v478 = vadd.f32 %v354, %v477
        %v479 = vpop.f32.mrf.mxu0
        %v480 = vadd.f32 %v354, %v479
        %481 = vdwg.mxu0
        %482 = vst [vmem:[#allocation2] sm:$0xff] %v443
        %483 = vst [vmem:[#allocation2 + $0x8] sm:$0xff] %v445
        %484 = vst [vmem:[#allocation2 + $0x10] sm:$0xff] %v448
        %485 = vst [vmem:[#allocation2 + $0x18] sm:$0xff] %v450
        %486 = vst [vmem:[#allocation2 + $0x20] sm:$0xff] %v453
        %487 = vst [vmem:[#allocation2 + $0x28] sm:$0xff] %v455
        %488 = vst [vmem:[#allocation2 + $0x30] sm:$0xff] %v458
        %489 = vst [vmem:[#allocation2 + $0x38] sm:$0xff] %v460
        %490 = vst [vmem:[#allocation2 + $0x40] sm:$0xff] %v463
        %491 = vst [vmem:[#allocation2 + $0x48] sm:$0xff] %v465
        %492 = vst [vmem:[#allocation2 + $0x50] sm:$0xff] %v468
        %493 = vst [vmem:[#allocation2 + $0x58] sm:$0xff] %v470
        %494 = vst [vmem:[#allocation2 + $0x60] sm:$0xff] %v473
        %495 = vst [vmem:[#allocation2 + $0x68] sm:$0xff] %v475
        %496 = vst [vmem:[#allocation2 + $0x70] sm:$0xff] %v478
        %497 = vst [vmem:[#allocation2 + $0x78] sm:$0xff] %v480
        %v498 = vld [vmem:[%s2] sm:$0xf]
        %v499 = vld [vmem:[%s2 + $0x4] sm:$0xf]
        %v500 = vld [vmem:[%s2 + $0x8] sm:$0xf]
        %v501 = vld [vmem:[%s2 + $0xc] sm:$0xf]
        %v502 = vld [vmem:[%s4] sm:$0x1]
        %v504 = vperm.slane %v502, 0
        %v505 = vld [vmem:[#allocation2] sm:$0xff]
        %v506 = vld [vmem:[#allocation2 + $0x8] sm:$0xff]
        %v507 = vld [vmem:[#allocation2 + $0x10] sm:$0xff]
        %v508 = vld [vmem:[#allocation2 + $0x18] sm:$0xff]
        %v513 = vunpack.c.l.b16 %v498
        %v514 = vunpack.c.l.b16 %v499
        %v515 = vunpack.c.l.b16 %v500
        %v516 = vunpack.c.l.b16 %v501
        %v517 = vpack.c.b16 %v514, %v513
        %v518 = vpack.c.b16 %v516, %v515
        %v522 = vsel %vm408, 0, 0
        %524 = vmatpush.bf16.msra.mxu0 0
        %525 = vmatpush.bf16.msra.mxu0 0
        %526 = vmatpush.bf16.msra.mxu0 0
        %527 = vmatpush.bf16.msra.mxu0 0
        %528 = vmatpush.bf16.msra.mxu0 0
        %529 = vmatpush.bf16.msra.mxu0 0
        %530 = vmatpush.bf16.msra.mxu0 %v518
        %531 = vmatpush.bf16.msra.mxu0 %v517
        %532 = vmatmul.bf16.gmra.mxu0 %v522
        %v533 = vpop.f32.mrf.mxu0
        %v534 = vadd.f32 0.0, %v533
        %v535 = vpop.f32.mrf.mxu0
        %v536 = vadd.f32 0.0, %v535
        %537 = vmatmul.bf16.gmra.mxu0 %v522
        %v538 = vpop.f32.mrf.mxu0
        %v539 = vadd.f32 0.0, %v538
        %v540 = vpop.f32.mrf.mxu0
        %v541 = vadd.f32 0.0, %v540
        %542 = vdwg.mxu0
        %v543 = vadd.f32 %v505, %v534
        %v544 = vadd.f32 %v506, %v536
        %v545 = vadd.f32 %v507, %v539
        %v546 = vadd.f32 %v508, %v541
        %v547 = vxor.u32 %v543, 2147483648
        %v548 = vxor.u32 %v544, 2147483648
        %v549 = vxor.u32 %v545, 2147483648
        %v550 = vxor.u32 %v546, 2147483648
        %v551 = vmul.f32 %v547, 1.442695
        %v552 = vpow.pop %v551
        %v553 = vmul.f32 %v548, 1.442695
        %v554 = vpow.pop %v553
        %v555 = vmul.f32 %v549, 1.442695
        %v556 = vpow.pop %v555
        %v557 = vmul.f32 %v550, 1.442695
        %v558 = vpow.pop %v557
        %v559 = vadd.f32 %v552, 1.0
        %v560 = vadd.f32 %v554, 1.0
        %v561 = vadd.f32 %v556, 1.0
        %v562 = vadd.f32 %v558, 1.0
        %v563 = vrcp.pop %v559
        %v564 = vmul.f32 %v559, %v563
        %v565 = vsub.f32 1.0, %v564
        %v566 = vmul.f32 %v563, %v565
        %v567 = vadd.f32 %v563, %v566
        %vm568 = vweird.f32 %v559
        %vm569 = vweird.f32 %v563
        %vm570 = vmor %vm568, %vm569
        %v571 = vsel %vm570, %v563, %v567
        %v572 = vand.u32 2147483647, %v559
        %vm573 = vcmp.eq.f32.partialorder %v572, 8.507059e+37
        %v574 = vand.u32 %v559, 2147483648
        %v575 = vor.u32 1.1754944e-38, %v574
        %v576 = vsel %vm573, %v575, %v571
        %v577 = vmul.f32 1.0, %v576
        %v578 = vrcp.pop %v560
        %v579 = vmul.f32 %v560, %v578
        %v580 = vsub.f32 1.0, %v579
        %v581 = vmul.f32 %v578, %v580
        %v582 = vadd.f32 %v578, %v581
        %vm583 = vweird.f32 %v560
        %vm584 = vweird.f32 %v578
        %vm585 = vmor %vm583, %vm584
        %v586 = vsel %vm585, %v578, %v582
        %v587 = vand.u32 2147483647, %v560
        %vm588 = vcmp.eq.f32.partialorder %v587, 8.507059e+37
        %v589 = vand.u32 %v560, 2147483648
        %v590 = vor.u32 1.1754944e-38, %v589
        %v591 = vsel %vm588, %v590, %v586
        %v592 = vmul.f32 1.0, %v591
        %v593 = vrcp.pop %v561
        %v594 = vmul.f32 %v561, %v593
        %v595 = vsub.f32 1.0, %v594
        %v596 = vmul.f32 %v593, %v595
        %v597 = vadd.f32 %v593, %v596
        %vm598 = vweird.f32 %v561
        %vm599 = vweird.f32 %v593
        %vm600 = vmor %vm598, %vm599
        %v601 = vsel %vm600, %v593, %v597
        %v602 = vand.u32 2147483647, %v561
        %vm603 = vcmp.eq.f32.partialorder %v602, 8.507059e+37
        %v604 = vand.u32 %v561, 2147483648
        %v605 = vor.u32 1.1754944e-38, %v604
        %v606 = vsel %vm603, %v605, %v601
        %v607 = vmul.f32 1.0, %v606
        %v608 = vrcp.pop %v562
        %v609 = vmul.f32 %v562, %v608
        %v610 = vsub.f32 1.0, %v609
        %v611 = vmul.f32 %v608, %v610
        %v612 = vadd.f32 %v608, %v611
        %vm613 = vweird.f32 %v562
        %vm614 = vweird.f32 %v608
        %vm615 = vmor %vm613, %vm614
        %v616 = vsel %vm615, %v608, %v612
        %v617 = vand.u32 2147483647, %v562
        %vm618 = vcmp.eq.f32.partialorder %v617, 8.507059e+37
        %v619 = vand.u32 %v562, 2147483648
        %v620 = vor.u32 1.1754944e-38, %v619
        %v621 = vsel %vm618, %v620, %v616
        %v622 = vmul.f32 1.0, %v621
        %v623 = vtanh.pop %v543
        %v624 = vtanh.pop %v544
        %v625 = vtanh.pop %v545
        %v626 = vtanh.pop %v546
        %v627 = vmul.f32 %v577, 0.0
        %v628 = vmul.f32 %v592, 0.0
        %v629 = vmul.f32 %v607, 0.0
        %v630 = vmul.f32 %v622, 0.0
        %635 = vrot.lane.b32.xlu0 %v623, 64
        %v636 = vpop.permute.xlu0 %635
        %637 = vrot.lane.b32.xlu0 %v624, 64
        %v638 = vpop.permute.xlu0 %637
        %639 = vrot.lane.b32.xlu0 %v625, 64
        %v640 = vpop.permute.xlu0 %639
        %641 = vrot.lane.b32.xlu0 %v626, 64
        %v642 = vpop.permute.xlu0 %641
        %v647 = vmul.f32 %v577, %v636
        %v648 = vmul.f32 %v592, %v638
        %v649 = vmul.f32 %v607, %v640
        %v650 = vmul.f32 %v622, %v642
        %655 = vrot.lane.b32.xlu0 %v647, 32
        %v656 = vpop.permute.xlu0 %655
        %657 = vrot.lane.b32.xlu0 %v648, 32
        %v658 = vpop.permute.xlu0 %657
        %659 = vrot.lane.b32.xlu0 %v649, 32
        %v660 = vpop.permute.xlu0 %659
        %661 = vrot.lane.b32.xlu0 %v650, 32
        %v662 = vpop.permute.xlu0 %661
        %v667 = vadd.f32 %v627, %v656
        %v668 = vadd.f32 %v628, %v658
        %v669 = vadd.f32 %v629, %v660
        %v670 = vadd.f32 %v630, %v662
        %v671 = vtanh.pop %v667
        %v672 = vtanh.pop %v668
        %v673 = vtanh.pop %v669
        %v674 = vtanh.pop %v670
        %679 = vrot.lane.b32.xlu0 %v671, 64
        %v680 = vpop.permute.xlu0 %679
        %681 = vrot.lane.b32.xlu0 %v672, 64
        %v682 = vpop.permute.xlu0 %681
        %683 = vrot.lane.b32.xlu0 %v673, 64
        %v684 = vpop.permute.xlu0 %683
        %685 = vrot.lane.b32.xlu0 %v674, 64
        %v686 = vpop.permute.xlu0 %685
        %v691 = vmul.f32 %v577, %v680
        %v692 = vmul.f32 %v592, %v682
        %v693 = vmul.f32 %v607, %v684
        %v694 = vmul.f32 %v622, %v686
        %695 = vrot.lane.b32.xlu0 %v504, 96
        %v696 = vpop.permute.xlu0 %695
        %v698 = vmul.f32 %v691, %v696
        %v699 = vmul.f32 %v692, %v696
        %v700 = vmul.f32 %v693, %v696
        %v701 = vmul.f32 %v694, %v696
        %706 = vrot.lane.b32.xlu0 %v698, 32
        %v707 = vpop.permute.xlu0 %706
        %708 = vrot.lane.b32.xlu0 %v699, 32
        %v709 = vpop.permute.xlu0 %708
        %710 = vrot.lane.b32.xlu0 %v700, 32
        %v711 = vpop.permute.xlu0 %710
        %712 = vrot.lane.b32.xlu0 %v701, 32
        %v713 = vpop.permute.xlu0 %712
        %v718 = vsel %vm408, %v707, 0.0
        %719 = vadd.xlane.f32.xlu0 %v718
        %v720 = vpop.xlane.xlu0 %719
        %v721 = vsel %vm408, %v709, 0.0
        %722 = vadd.xlane.f32.xlu0 %v721
        %v723 = vpop.xlane.xlu0 %722
        %v724 = vsel %vm408, %v711, 0.0
        %725 = vadd.xlane.f32.xlu0 %v724
        %v726 = vpop.xlane.xlu0 %725
        %v727 = vsel %vm408, %v713, 0.0
        %728 = vadd.xlane.f32.xlu0 %v727
        %v729 = vpop.xlane.xlu0 %728
        %v730 = vsub.f32 -inf, %v720
        %v731 = vsub.f32 -inf, %v723
        %v732 = vsub.f32 -inf, %v726
        %v733 = vsub.f32 -inf, %v729
        %v734 = vmul.f32 %v730, 1.442695
        %v735 = vpow.pop %v734
        %v736 = vmul.f32 %v731, 1.442695
        %v737 = vpow.pop %v736
        %v738 = vmul.f32 %v732, 1.442695
        %v739 = vpow.pop %v738
        %v740 = vmul.f32 %v733, 1.442695
        %v741 = vpow.pop %v740
        %v742 = vsub.f32 %v720, %v720
        %v743 = vsub.f32 %v723, %v723
        %v744 = vsub.f32 %v726, %v726
        %v745 = vsub.f32 %v729, %v729
        %v746 = vmul.f32 %v742, 1.442695
        %v747 = vpow.pop %v746
        %v748 = vmul.f32 %v743, 1.442695
        %v749 = vpow.pop %v748
        %v750 = vmul.f32 %v744, 1.442695
        %v751 = vpow.pop %v750
        %v752 = vmul.f32 %v745, 1.442695
        %v753 = vpow.pop %v752
        %v754 = vmul.f32 %v735, 0.0
        %v755 = vmul.f32 %v737, 0.0
        %v756 = vmul.f32 %v739, 0.0
        %v757 = vmul.f32 %v741, 0.0
        %v758 = vadd.f32 %v754, %v747
        %v759 = vadd.f32 %v755, %v749
        %v760 = vadd.f32 %v756, %v751
        %v761 = vadd.f32 %v757, %v753
        %v762 = vmul.f32 %v747, %v691
        %v763 = vmul.f32 %v749, %v692
        %v764 = vmul.f32 %v751, %v693
        %v765 = vmul.f32 %v753, %v694
        %v766 = vadd.f32 %v754, %v762
        %v767 = vadd.f32 %v755, %v763
        %v768 = vadd.f32 %v756, %v764
        %v769 = vadd.f32 %v757, %v765
        %v770 = vld [vmem:[#allocation2 + $0x20] sm:$0xff]
        %v771 = vld [vmem:[#allocation2 + $0x28] sm:$0xff]
        %v772 = vld [vmem:[#allocation2 + $0x30] sm:$0xff]
        %v773 = vld [vmem:[#allocation2 + $0x38] sm:$0xff]
        %v774 = vpack.c.bf16 %v692, %v691
        %v775 = vpack.c.bf16 %v694, %v693
        %778 = vrot.lane.b32.xlu0 %v774, 32
        %v779 = vpop.permute.xlu0 %778
        %780 = vrot.lane.b32.xlu0 %v775, 32
        %v781 = vpop.permute.xlu0 %780
        %v783 = vsel %vm408, %v779, 0
        %v786 = vsel %vm408, %v781, 0
        %788 = vmatpush.bf16.msra.mxu0 0
        %789 = vmatpush.bf16.msra.mxu0 0
        %790 = vmatpush.bf16.msra.mxu0 0
        %791 = vmatpush.bf16.msra.mxu0 0
        %792 = vmatpush.bf16.msra.mxu0 0
        %793 = vmatpush.bf16.msra.mxu0 0
        %794 = vmatpush.bf16.msra.mxu0 %v518
        %795 = vmatpush.bf16.msra.mxu0 %v517
        %796 = vmatmul.bf16.gmra.mxu0 %v783
        %v797 = vpop.f32.mrf.mxu0
        %v798 = vadd.f32 0.0, %v797
        %v799 = vpop.f32.mrf.mxu0
        %v800 = vadd.f32 0.0, %v799
        %801 = vmatmul.bf16.gmra.mxu0 %v786
        %v802 = vpop.f32.mrf.mxu0
        %v803 = vadd.f32 0.0, %v802
        %v804 = vpop.f32.mrf.mxu0
        %v805 = vadd.f32 0.0, %v804
        %806 = vdwg.mxu0
        %v807 = vadd.f32 %v770, %v798
        %v808 = vadd.f32 %v771, %v800
        %v809 = vadd.f32 %v772, %v803
        %v810 = vadd.f32 %v773, %v805
        %v811 = vxor.u32 %v807, 2147483648
        %v812 = vxor.u32 %v808, 2147483648
        %v813 = vxor.u32 %v809, 2147483648
        %v814 = vxor.u32 %v810, 2147483648
        %v815 = vmul.f32 %v811, 1.442695
        %v816 = vpow.pop %v815
        %v817 = vmul.f32 %v812, 1.442695
        %v818 = vpow.pop %v817
        %v819 = vmul.f32 %v813, 1.442695
        %v820 = vpow.pop %v819
        %v821 = vmul.f32 %v814, 1.442695
        %v822 = vpow.pop %v821
        %v823 = vadd.f32 %v816, 1.0
        %v824 = vadd.f32 %v818, 1.0
        %v825 = vadd.f32 %v820, 1.0
        %v826 = vadd.f32 %v822, 1.0
        %v827 = vrcp.pop %v823
        %v828 = vmul.f32 %v823, %v827
        %v829 = vsub.f32 1.0, %v828
        %v830 = vmul.f32 %v827, %v829
        %v831 = vadd.f32 %v827, %v830
        %vm832 = vweird.f32 %v823
        %vm833 = vweird.f32 %v827
        %vm834 = vmor %vm832, %vm833
        %v835 = vsel %vm834, %v827, %v831
        %v836 = vand.u32 2147483647, %v823
        %vm837 = vcmp.eq.f32.partialorder %v836, 8.507059e+37
        %v838 = vand.u32 %v823, 2147483648
        %v839 = vor.u32 1.1754944e-38, %v838
        %v840 = vsel %vm837, %v839, %v835
        %v841 = vmul.f32 1.0, %v840
        %v842 = vrcp.pop %v824
        %v843 = vmul.f32 %v824, %v842
        %v844 = vsub.f32 1.0, %v843
        %v845 = vmul.f32 %v842, %v844
        %v846 = vadd.f32 %v842, %v845
        %vm847 = vweird.f32 %v824
        %vm848 = vweird.f32 %v842
        %vm849 = vmor %vm847, %vm848
        %v850 = vsel %vm849, %v842, %v846
        %v851 = vand.u32 2147483647, %v824
        %vm852 = vcmp.eq.f32.partialorder %v851, 8.507059e+37
        %v853 = vand.u32 %v824, 2147483648
        %v854 = vor.u32 1.1754944e-38, %v853
        %v855 = vsel %vm852, %v854, %v850
        %v856 = vmul.f32 1.0, %v855
        %v857 = vrcp.pop %v825
        %v858 = vmul.f32 %v825, %v857
        %v859 = vsub.f32 1.0, %v858
        %v860 = vmul.f32 %v857, %v859
        %v861 = vadd.f32 %v857, %v860
        %vm862 = vweird.f32 %v825
        %vm863 = vweird.f32 %v857
        %vm864 = vmor %vm862, %vm863
        %v865 = vsel %vm864, %v857, %v861
        %v866 = vand.u32 2147483647, %v825
        %vm867 = vcmp.eq.f32.partialorder %v866, 8.507059e+37
        %v868 = vand.u32 %v825, 2147483648
        %v869 = vor.u32 1.1754944e-38, %v868
        %v870 = vsel %vm867, %v869, %v865
        %v871 = vmul.f32 1.0, %v870
        %v872 = vrcp.pop %v826
        %v873 = vmul.f32 %v826, %v872
        %v874 = vsub.f32 1.0, %v873
        %v875 = vmul.f32 %v872, %v874
        %v876 = vadd.f32 %v872, %v875
        %vm877 = vweird.f32 %v826
        %vm878 = vweird.f32 %v872
        %vm879 = vmor %vm877, %vm878
        %v880 = vsel %vm879, %v872, %v876
        %v881 = vand.u32 2147483647, %v826
        %vm882 = vcmp.eq.f32.partialorder %v881, 8.507059e+37
        %v883 = vand.u32 %v826, 2147483648
        %v884 = vor.u32 1.1754944e-38, %v883
        %v885 = vsel %vm882, %v884, %v880
        %v886 = vmul.f32 1.0, %v885
        %v887 = vtanh.pop %v807
        %v888 = vtanh.pop %v808
        %v889 = vtanh.pop %v809
        %v890 = vtanh.pop %v810
        %v891 = vmul.f32 %v841, %v667
        %v892 = vmul.f32 %v856, %v668
        %v893 = vmul.f32 %v871, %v669
        %v894 = vmul.f32 %v886, %v670
        %899 = vrot.lane.b32.xlu0 %v887, 64
        %v900 = vpop.permute.xlu0 %899
        %901 = vrot.lane.b32.xlu0 %v888, 64
        %v902 = vpop.permute.xlu0 %901
        %903 = vrot.lane.b32.xlu0 %v889, 64
        %v904 = vpop.permute.xlu0 %903
        %905 = vrot.lane.b32.xlu0 %v890, 64
        %v906 = vpop.permute.xlu0 %905
        %v911 = vmul.f32 %v841, %v900
        %v912 = vmul.f32 %v856, %v902
        %v913 = vmul.f32 %v871, %v904
        %v914 = vmul.f32 %v886, %v906
        %919 = vrot.lane.b32.xlu0 %v911, 32
        %v920 = vpop.permute.xlu0 %919
        %921 = vrot.lane.b32.xlu0 %v912, 32
        %v922 = vpop.permute.xlu0 %921
        %923 = vrot.lane.b32.xlu0 %v913, 32
        %v924 = vpop.permute.xlu0 %923
        %925 = vrot.lane.b32.xlu0 %v914, 32
        %v926 = vpop.permute.xlu0 %925
        %v931 = vadd.f32 %v891, %v920
        %v932 = vadd.f32 %v892, %v922
        %v933 = vadd.f32 %v893, %v924
        %v934 = vadd.f32 %v894, %v926
        %v935 = vtanh.pop %v931
        %v936 = vtanh.pop %v932
        %v937 = vtanh.pop %v933
        %v938 = vtanh.pop %v934
        %943 = vrot.lane.b32.xlu0 %v935, 64
        %v944 = vpop.permute.xlu0 %943
        %945 = vrot.lane.b32.xlu0 %v936, 64
        %v946 = vpop.permute.xlu0 %945
        %947 = vrot.lane.b32.xlu0 %v937, 64
        %v948 = vpop.permute.xlu0 %947
        %949 = vrot.lane.b32.xlu0 %v938, 64
        %v950 = vpop.permute.xlu0 %949
        %v955 = vmul.f32 %v841, %v944
        %v956 = vmul.f32 %v856, %v946
        %v957 = vmul.f32 %v871, %v948
        %v958 = vmul.f32 %v886, %v950
        %v959 = vmul.f32 %v955, %v696
        %v960 = vmul.f32 %v956, %v696
        %v961 = vmul.f32 %v957, %v696
        %v962 = vmul.f32 %v958, %v696
        %967 = vrot.lane.b32.xlu0 %v959, 32
        %v968 = vpop.permute.xlu0 %967
        %969 = vrot.lane.b32.xlu0 %v960, 32
        %v970 = vpop.permute.xlu0 %969
        %971 = vrot.lane.b32.xlu0 %v961, 32
        %v972 = vpop.permute.xlu0 %971
        %973 = vrot.lane.b32.xlu0 %v962, 32
        %v974 = vpop.permute.xlu0 %973
        %v979 = vsel %vm408, %v968, 0.0
        %980 = vadd.xlane.f32.xlu0 %v979
        %v981 = vpop.xlane.xlu0 %980
        %v982 = vsel %vm408, %v970, 0.0
        %983 = vadd.xlane.f32.xlu0 %v982
        %v984 = vpop.xlane.xlu0 %983
        %v985 = vsel %vm408, %v972, 0.0
        %986 = vadd.xlane.f32.xlu0 %v985
        %v987 = vpop.xlane.xlu0 %986
        %v988 = vsel %vm408, %v974, 0.0
        %989 = vadd.xlane.f32.xlu0 %v988
        %v990 = vpop.xlane.xlu0 %989
        %v991 = vmax.f32 %v720, %v981
        %v992 = vmax.f32 %v723, %v984
        %v993 = vmax.f32 %v726, %v987
        %v994 = vmax.f32 %v729, %v990
        %v995 = vsub.f32 %v720, %v991
        %v996 = vsub.f32 %v723, %v992
        %v997 = vsub.f32 %v726, %v993
        %v998 = vsub.f32 %v729, %v994
        %v999 = vmul.f32 %v995, 1.442695
        %v1000 = vpow.pop %v999
        %v1001 = vmul.f32 %v996, 1.442695
        %v1002 = vpow.pop %v1001
        %v1003 = vmul.f32 %v997, 1.442695
        %v1004 = vpow.pop %v1003
        %v1005 = vmul.f32 %v998, 1.442695
        %v1006 = vpow.pop %v1005
        %v1007 = vsub.f32 %v981, %v991
        %v1008 = vsub.f32 %v984, %v992
        %v1009 = vsub.f32 %v987, %v993
        %v1010 = vsub.f32 %v990, %v994
        %v1011 = vmul.f32 %v1007, 1.442695
        %v1012 = vpow.pop %v1011
        %v1013 = vmul.f32 %v1008, 1.442695
        %v1014 = vpow.pop %v1013
        %v1015 = vmul.f32 %v1009, 1.442695
        %v1016 = vpow.pop %v1015
        %v1017 = vmul.f32 %v1010, 1.442695
        %v1018 = vpow.pop %v1017
        %v1019 = vmul.f32 %v1000, %v758
        %v1020 = vmul.f32 %v1002, %v759
        %v1021 = vmul.f32 %v1004, %v760
        %v1022 = vmul.f32 %v1006, %v761
        %v1023 = vadd.f32 %v1019, %v1012
        %v1024 = vadd.f32 %v1020, %v1014
        %v1025 = vadd.f32 %v1021, %v1016
        %v1026 = vadd.f32 %v1022, %v1018
        %v1027 = vmul.f32 %v1000, %v766
        %v1028 = vmul.f32 %v1002, %v767
        %v1029 = vmul.f32 %v1004, %v768
        %v1030 = vmul.f32 %v1006, %v769
        %v1031 = vmul.f32 %v1012, %v955
        %v1032 = vmul.f32 %v1014, %v956
        %v1033 = vmul.f32 %v1016, %v957
        %v1034 = vmul.f32 %v1018, %v958
        %v1035 = vadd.f32 %v1027, %v1031
        %v1036 = vadd.f32 %v1028, %v1032
        %v1037 = vadd.f32 %v1029, %v1033
        %v1038 = vadd.f32 %v1030, %v1034
        %v1039 = vld [vmem:[#allocation2 + $0x40] sm:$0xff]
        %v1040 = vld [vmem:[#allocation2 + $0x48] sm:$0xff]
        %v1041 = vld [vmem:[#allocation2 + $0x50] sm:$0xff]
        %v1042 = vld [vmem:[#allocation2 + $0x58] sm:$0xff]
        %v1043 = vpack.c.bf16 %v956, %v955
        %v1044 = vpack.c.bf16 %v958, %v957
        %1047 = vrot.lane.b32.xlu0 %v1043, 32
        %v1048 = vpop.permute.xlu0 %1047
        %1049 = vrot.lane.b32.xlu0 %v1044, 32
        %v1050 = vpop.permute.xlu0 %1049
        %v1052 = vsel %vm408, %v1048, 0
        %v1055 = vsel %vm408, %v1050, 0
        %1057 = vmatpush.bf16.msra.mxu0 0
        %1058 = vmatpush.bf16.msra.mxu0 0
        %1059 = vmatpush.bf16.msra.mxu0 0
        %1060 = vmatpush.bf16.msra.mxu0 0
        %1061 = vmatpush.bf16.msra.mxu0 0
        %1062 = vmatpush.bf16.msra.mxu0 0
        %1063 = vmatpush.bf16.msra.mxu0 %v518
        %1064 = vmatpush.bf16.msra.mxu0 %v517
        %1065 = vmatmul.bf16.gmra.mxu0 %v1052
        %v1066 = vpop.f32.mrf.mxu0
        %v1067 = vadd.f32 0.0, %v1066
        %v1068 = vpop.f32.mrf.mxu0
        %v1069 = vadd.f32 0.0, %v1068
        %1070 = vmatmul.bf16.gmra.mxu0 %v1055
        %v1071 = vpop.f32.mrf.mxu0
        %v1072 = vadd.f32 0.0, %v1071
        %v1073 = vpop.f32.mrf.mxu0
        %v1074 = vadd.f32 0.0, %v1073
        %1075 = vdwg.mxu0
        %v1076 = vadd.f32 %v1039, %v1067
        %v1077 = vadd.f32 %v1040, %v1069
        %v1078 = vadd.f32 %v1041, %v1072
        %v1079 = vadd.f32 %v1042, %v1074
        %v1080 = vxor.u32 %v1076, 2147483648
        %v1081 = vxor.u32 %v1077, 2147483648
        %v1082 = vxor.u32 %v1078, 2147483648
        %v1083 = vxor.u32 %v1079, 2147483648
        %v1084 = vmul.f32 %v1080, 1.442695
        %v1085 = vpow.pop %v1084
        %v1086 = vmul.f32 %v1081, 1.442695
        %v1087 = vpow.pop %v1086
        %v1088 = vmul.f32 %v1082, 1.442695
        %v1089 = vpow.pop %v1088
        %v1090 = vmul.f32 %v1083, 1.442695
        %v1091 = vpow.pop %v1090
        %v1092 = vadd.f32 %v1085, 1.0
        %v1093 = vadd.f32 %v1087, 1.0
        %v1094 = vadd.f32 %v1089, 1.0
        %v1095 = vadd.f32 %v1091, 1.0
        %v1096 = vrcp.pop %v1092
        %v1097 = vmul.f32 %v1092, %v1096
        %v1098 = vsub.f32 1.0, %v1097
        %v1099 = vmul.f32 %v1096, %v1098
        %v1100 = vadd.f32 %v1096, %v1099
        %vm1101 = vweird.f32 %v1092
        %vm1102 = vweird.f32 %v1096
        %vm1103 = vmor %vm1101, %vm1102
        %v1104 = vsel %vm1103, %v1096, %v1100
        %v1105 = vand.u32 2147483647, %v1092
        %vm1106 = vcmp.eq.f32.partialorder %v1105, 8.507059e+37
        %v1107 = vand.u32 %v1092, 2147483648
        %v1108 = vor.u32 1.1754944e-38, %v1107
        %v1109 = vsel %vm1106, %v1108, %v1104
        %v1110 = vmul.f32 1.0, %v1109
        %v1111 = vrcp.pop %v1093
        %v1112 = vmul.f32 %v1093, %v1111
        %v1113 = vsub.f32 1.0, %v1112
        %v1114 = vmul.f32 %v1111, %v1113
        %v1115 = vadd.f32 %v1111, %v1114
        %vm1116 = vweird.f32 %v1093
        %vm1117 = vweird.f32 %v1111
        %vm1118 = vmor %vm1116, %vm1117
        %v1119 = vsel %vm1118, %v1111, %v1115
        %v1120 = vand.u32 2147483647, %v1093
        %vm1121 = vcmp.eq.f32.partialorder %v1120, 8.507059e+37
        %v1122 = vand.u32 %v1093, 2147483648
        %v1123 = vor.u32 1.1754944e-38, %v1122
        %v1124 = vsel %vm1121, %v1123, %v1119
        %v1125 = vmul.f32 1.0, %v1124
        %v1126 = vrcp.pop %v1094
        %v1127 = vmul.f32 %v1094, %v1126
        %v1128 = vsub.f32 1.0, %v1127
        %v1129 = vmul.f32 %v1126, %v1128
        %v1130 = vadd.f32 %v1126, %v1129
        %vm1131 = vweird.f32 %v1094
        %vm1132 = vweird.f32 %v1126
        %vm1133 = vmor %vm1131, %vm1132
        %v1134 = vsel %vm1133, %v1126, %v1130
        %v1135 = vand.u32 2147483647, %v1094
        %vm1136 = vcmp.eq.f32.partialorder %v1135, 8.507059e+37
        %v1137 = vand.u32 %v1094, 2147483648
        %v1138 = vor.u32 1.1754944e-38, %v1137
        %v1139 = vsel %vm1136, %v1138, %v1134
        %v1140 = vmul.f32 1.0, %v1139
        %v1141 = vrcp.pop %v1095
        %v1142 = vmul.f32 %v1095, %v1141
        %v1143 = vsub.f32 1.0, %v1142
        %v1144 = vmul.f32 %v1141, %v1143
        %v1145 = vadd.f32 %v1141, %v1144
        %vm1146 = vweird.f32 %v1095
        %vm1147 = vweird.f32 %v1141
        %vm1148 = vmor %vm1146, %vm1147
        %v1149 = vsel %vm1148, %v1141, %v1145
        %v1150 = vand.u32 2147483647, %v1095
        %vm1151 = vcmp.eq.f32.partialorder %v1150, 8.507059e+37
        %v1152 = vand.u32 %v1095, 2147483648
        %v1153 = vor.u32 1.1754944e-38, %v1152
        %v1154 = vsel %vm1151, %v1153, %v1149
        %v1155 = vmul.f32 1.0, %v1154
        %v1156 = vtanh.pop %v1076
        %v1157 = vtanh.pop %v1077
        %v1158 = vtanh.pop %v1078
        %v1159 = vtanh.pop %v1079
        %v1160 = vmul.f32 %v1110, %v931
        %v1161 = vmul.f32 %v1125, %v932
        %v1162 = vmul.f32 %v1140, %v933
        %v1163 = vmul.f32 %v1155, %v934
        %1168 = vrot.lane.b32.xlu0 %v1156, 64
        %v1169 = vpop.permute.xlu0 %1168
        %1170 = vrot.lane.b32.xlu0 %v1157, 64
        %v1171 = vpop.permute.xlu0 %1170
        %1172 = vrot.lane.b32.xlu0 %v1158, 64
        %v1173 = vpop.permute.xlu0 %1172
        %1174 = vrot.lane.b32.xlu0 %v1159, 64
        %v1175 = vpop.permute.xlu0 %1174
        %v1180 = vmul.f32 %v1110, %v1169
        %v1181 = vmul.f32 %v1125, %v1171
        %v1182 = vmul.f32 %v1140, %v1173
        %v1183 = vmul.f32 %v1155, %v1175
        %1188 = vrot.lane.b32.xlu0 %v1180, 32
        %v1189 = vpop.permute.xlu0 %1188
        %1190 = vrot.lane.b32.xlu0 %v1181, 32
        %v1191 = vpop.permute.xlu0 %1190
        %1192 = vrot.lane.b32.xlu0 %v1182, 32
        %v1193 = vpop.permute.xlu0 %1192
        %1194 = vrot.lane.b32.xlu0 %v1183, 32
        %v1195 = vpop.permute.xlu0 %1194
        %v1200 = vadd.f32 %v1160, %v1189
        %v1201 = vadd.f32 %v1161, %v1191
        %v1202 = vadd.f32 %v1162, %v1193
        %v1203 = vadd.f32 %v1163, %v1195
        %v1204 = vtanh.pop %v1200
        %v1205 = vtanh.pop %v1201
        %v1206 = vtanh.pop %v1202
        %v1207 = vtanh.pop %v1203
        %1212 = vrot.lane.b32.xlu0 %v1204, 64
        %v1213 = vpop.permute.xlu0 %1212
        %1214 = vrot.lane.b32.xlu0 %v1205, 64
        %v1215 = vpop.permute.xlu0 %1214
        %1216 = vrot.lane.b32.xlu0 %v1206, 64
        %v1217 = vpop.permute.xlu0 %1216
        %1218 = vrot.lane.b32.xlu0 %v1207, 64
        %v1219 = vpop.permute.xlu0 %1218
        %v1224 = vmul.f32 %v1110, %v1213
        %v1225 = vmul.f32 %v1125, %v1215
        %v1226 = vmul.f32 %v1140, %v1217
        %v1227 = vmul.f32 %v1155, %v1219
        %v1228 = vmul.f32 %v1224, %v696
        %v1229 = vmul.f32 %v1225, %v696
        %v1230 = vmul.f32 %v1226, %v696
        %v1231 = vmul.f32 %v1227, %v696
        %1236 = vrot.lane.b32.xlu0 %v1228, 32
        %v1237 = vpop.permute.xlu0 %1236
        %1238 = vrot.lane.b32.xlu0 %v1229, 32
        %v1239 = vpop.permute.xlu0 %1238
        %1240 = vrot.lane.b32.xlu0 %v1230, 32
        %v1241 = vpop.permute.xlu0 %1240
        %1242 = vrot.lane.b32.xlu0 %v1231, 32
        %v1243 = vpop.permute.xlu0 %1242
        %v1248 = vsel %vm408, %v1237, 0.0
        %1249 = vadd.xlane.f32.xlu0 %v1248
        %v1250 = vpop.xlane.xlu0 %1249
        %v1251 = vsel %vm408, %v1239, 0.0
        %1252 = vadd.xlane.f32.xlu0 %v1251
        %v1253 = vpop.xlane.xlu0 %1252
        %v1254 = vsel %vm408, %v1241, 0.0
        %1255 = vadd.xlane.f32.xlu0 %v1254
        %v1256 = vpop.xlane.xlu0 %1255
        %v1257 = vsel %vm408, %v1243, 0.0
        %1258 = vadd.xlane.f32.xlu0 %v1257
        %v1259 = vpop.xlane.xlu0 %1258
        %v1260 = vmax.f32 %v991, %v1250
        %v1261 = vmax.f32 %v992, %v1253
        %v1262 = vmax.f32 %v993, %v1256
        %v1263 = vmax.f32 %v994, %v1259
        %v1264 = vsub.f32 %v991, %v1260
        %v1265 = vsub.f32 %v992, %v1261
        %v1266 = vsub.f32 %v993, %v1262
        %v1267 = vsub.f32 %v994, %v1263
        %v1268 = vmul.f32 %v1264, 1.442695
        %v1269 = vpow.pop %v1268
        %v1270 = vmul.f32 %v1265, 1.442695
        %v1271 = vpow.pop %v1270
        %v1272 = vmul.f32 %v1266, 1.442695
        %v1273 = vpow.pop %v1272
        %v1274 = vmul.f32 %v1267, 1.442695
        %v1275 = vpow.pop %v1274
        %v1276 = vsub.f32 %v1250, %v1260
        %v1277 = vsub.f32 %v1253, %v1261
        %v1278 = vsub.f32 %v1256, %v1262
        %v1279 = vsub.f32 %v1259, %v1263
        %v1280 = vmul.f32 %v1276, 1.442695
        %v1281 = vpow.pop %v1280
        %v1282 = vmul.f32 %v1277, 1.442695
        %v1283 = vpow.pop %v1282
        %v1284 = vmul.f32 %v1278, 1.442695
        %v1285 = vpow.pop %v1284
        %v1286 = vmul.f32 %v1279, 1.442695
        %v1287 = vpow.pop %v1286
        %v1288 = vmul.f32 %v1269, %v1023
        %v1289 = vmul.f32 %v1271, %v1024
        %v1290 = vmul.f32 %v1273, %v1025
        %v1291 = vmul.f32 %v1275, %v1026
        %v1292 = vadd.f32 %v1288, %v1281
        %v1293 = vadd.f32 %v1289, %v1283
        %v1294 = vadd.f32 %v1290, %v1285
        %v1295 = vadd.f32 %v1291, %v1287
        %v1296 = vmul.f32 %v1269, %v1035
        %v1297 = vmul.f32 %v1271, %v1036
        %v1298 = vmul.f32 %v1273, %v1037
        %v1299 = vmul.f32 %v1275, %v1038
        %v1300 = vmul.f32 %v1281, %v1224
        %v1301 = vmul.f32 %v1283, %v1225
        %v1302 = vmul.f32 %v1285, %v1226
        %v1303 = vmul.f32 %v1287, %v1227
        %v1304 = vadd.f32 %v1296, %v1300
        %v1305 = vadd.f32 %v1297, %v1301
        %v1306 = vadd.f32 %v1298, %v1302
        %v1307 = vadd.f32 %v1299, %v1303
        %v1308 = vld [vmem:[#allocation2 + $0x60] sm:$0xff]
        %v1309 = vld [vmem:[#allocation2 + $0x68] sm:$0xff]
        %v1310 = vld [vmem:[#allocation2 + $0x70] sm:$0xff]
        %v1311 = vld [vmem:[#allocation2 + $0x78] sm:$0xff]
        %v1312 = vpack.c.bf16 %v1225, %v1224
        %v1313 = vpack.c.bf16 %v1227, %v1226
        %1316 = vrot.lane.b32.xlu0 %v1312, 32
        %v1317 = vpop.permute.xlu0 %1316
        %1318 = vrot.lane.b32.xlu0 %v1313, 32
        %v1319 = vpop.permute.xlu0 %1318
        %v1321 = vsel %vm408, %v1317, 0
        %v1324 = vsel %vm408, %v1319, 0
        %1326 = vmatpush.bf16.msra.mxu0 0
        %1327 = vmatpush.bf16.msra.mxu0 0
        %1328 = vmatpush.bf16.msra.mxu0 0
        %1329 = vmatpush.bf16.msra.mxu0 0
        %1330 = vmatpush.bf16.msra.mxu0 0
        %1331 = vmatpush.bf16.msra.mxu0 0
        %1332 = vmatpush.bf16.msra.mxu0 %v518
        %1333 = vmatpush.bf16.msra.mxu0 %v517
        %1334 = vmatmul.bf16.gmra.mxu0 %v1321
        %v1335 = vpop.f32.mrf.mxu0
        %v1336 = vadd.f32 0.0, %v1335
        %v1337 = vpop.f32.mrf.mxu0
        %v1338 = vadd.f32 0.0, %v1337
        %1339 = vmatmul.bf16.gmra.mxu0 %v1324
        %v1340 = vpop.f32.mrf.mxu0
        %v1341 = vadd.f32 0.0, %v1340
        %v1342 = vpop.f32.mrf.mxu0
        %v1343 = vadd.f32 0.0, %v1342
        %1344 = vdwg.mxu0
        %v1345 = vadd.f32 %v1308, %v1336
        %v1346 = vadd.f32 %v1309, %v1338
        %v1347 = vadd.f32 %v1310, %v1341
        %v1348 = vadd.f32 %v1311, %v1343
        %v1349 = vxor.u32 %v1345, 2147483648
        %v1350 = vxor.u32 %v1346, 2147483648
        %v1351 = vxor.u32 %v1347, 2147483648
        %v1352 = vxor.u32 %v1348, 2147483648
        %v1353 = vmul.f32 %v1349, 1.442695
        %v1354 = vpow.pop %v1353
        %v1355 = vmul.f32 %v1350, 1.442695
        %v1356 = vpow.pop %v1355
        %v1357 = vmul.f32 %v1351, 1.442695
        %v1358 = vpow.pop %v1357
        %v1359 = vmul.f32 %v1352, 1.442695
        %v1360 = vpow.pop %v1359
        %v1361 = vadd.f32 %v1354, 1.0
        %v1362 = vadd.f32 %v1356, 1.0
        %v1363 = vadd.f32 %v1358, 1.0
        %v1364 = vadd.f32 %v1360, 1.0
        %v1365 = vrcp.pop %v1361
        %v1366 = vmul.f32 %v1361, %v1365
        %v1367 = vsub.f32 1.0, %v1366
        %v1368 = vmul.f32 %v1365, %v1367
        %v1369 = vadd.f32 %v1365, %v1368
        %vm1370 = vweird.f32 %v1361
        %vm1371 = vweird.f32 %v1365
        %vm1372 = vmor %vm1370, %vm1371
        %v1373 = vsel %vm1372, %v1365, %v1369
        %v1374 = vand.u32 2147483647, %v1361
        %vm1375 = vcmp.eq.f32.partialorder %v1374, 8.507059e+37
        %v1376 = vand.u32 %v1361, 2147483648
        %v1377 = vor.u32 1.1754944e-38, %v1376
        %v1378 = vsel %vm1375, %v1377, %v1373
        %v1379 = vmul.f32 1.0, %v1378
        %v1380 = vrcp.pop %v1362
        %v1381 = vmul.f32 %v1362, %v1380
        %v1382 = vsub.f32 1.0, %v1381
        %v1383 = vmul.f32 %v1380, %v1382
        %v1384 = vadd.f32 %v1380, %v1383
        %vm1385 = vweird.f32 %v1362
        %vm1386 = vweird.f32 %v1380
        %vm1387 = vmor %vm1385, %vm1386
        %v1388 = vsel %vm1387, %v1380, %v1384
        %v1389 = vand.u32 2147483647, %v1362
        %vm1390 = vcmp.eq.f32.partialorder %v1389, 8.507059e+37
        %v1391 = vand.u32 %v1362, 2147483648
        %v1392 = vor.u32 1.1754944e-38, %v1391
        %v1393 = vsel %vm1390, %v1392, %v1388
        %v1394 = vmul.f32 1.0, %v1393
        %v1395 = vrcp.pop %v1363
        %v1396 = vmul.f32 %v1363, %v1395
        %v1397 = vsub.f32 1.0, %v1396
        %v1398 = vmul.f32 %v1395, %v1397
        %v1399 = vadd.f32 %v1395, %v1398
        %vm1400 = vweird.f32 %v1363
        %vm1401 = vweird.f32 %v1395
        %vm1402 = vmor %vm1400, %vm1401
        %v1403 = vsel %vm1402, %v1395, %v1399
        %v1404 = vand.u32 2147483647, %v1363
        %vm1405 = vcmp.eq.f32.partialorder %v1404, 8.507059e+37
        %v1406 = vand.u32 %v1363, 2147483648
        %v1407 = vor.u32 1.1754944e-38, %v1406
        %v1408 = vsel %vm1405, %v1407, %v1403
        %v1409 = vmul.f32 1.0, %v1408
        %v1410 = vrcp.pop %v1364
        %v1411 = vmul.f32 %v1364, %v1410
        %v1412 = vsub.f32 1.0, %v1411
        %v1413 = vmul.f32 %v1410, %v1412
        %v1414 = vadd.f32 %v1410, %v1413
        %vm1415 = vweird.f32 %v1364
        %vm1416 = vweird.f32 %v1410
        %vm1417 = vmor %vm1415, %vm1416
        %v1418 = vsel %vm1417, %v1410, %v1414
        %v1419 = vand.u32 2147483647, %v1364
        %vm1420 = vcmp.eq.f32.partialorder %v1419, 8.507059e+37
        %v1421 = vand.u32 %v1364, 2147483648
        %v1422 = vor.u32 1.1754944e-38, %v1421
        %v1423 = vsel %vm1420, %v1422, %v1418
        %v1424 = vmul.f32 1.0, %v1423
        %v1425 = vtanh.pop %v1345
        %v1426 = vtanh.pop %v1346
        %v1427 = vtanh.pop %v1347
        %v1428 = vtanh.pop %v1348
        %v1429 = vmul.f32 %v1379, %v1200
        %v1430 = vmul.f32 %v1394, %v1201
        %v1431 = vmul.f32 %v1409, %v1202
        %v1432 = vmul.f32 %v1424, %v1203
        %1437 = vrot.lane.b32.xlu0 %v1425, 64
        %v1438 = vpop.permute.xlu0 %1437
        %1439 = vrot.lane.b32.xlu0 %v1426, 64
        %v1440 = vpop.permute.xlu0 %1439
        %1441 = vrot.lane.b32.xlu0 %v1427, 64
        %v1442 = vpop.permute.xlu0 %1441
        %1443 = vrot.lane.b32.xlu0 %v1428, 64
        %v1444 = vpop.permute.xlu0 %1443
        %v1449 = vmul.f32 %v1379, %v1438
        %v1450 = vmul.f32 %v1394, %v1440
        %v1451 = vmul.f32 %v1409, %v1442
        %v1452 = vmul.f32 %v1424, %v1444
        %1457 = vrot.lane.b32.xlu0 %v1449, 32
        %v1458 = vpop.permute.xlu0 %1457
        %1459 = vrot.lane.b32.xlu0 %v1450, 32
        %v1460 = vpop.permute.xlu0 %1459
        %1461 = vrot.lane.b32.xlu0 %v1451, 32
        %v1462 = vpop.permute.xlu0 %1461
        %1463 = vrot.lane.b32.xlu0 %v1452, 32
        %v1464 = vpop.permute.xlu0 %1463
        %v1469 = vadd.f32 %v1429, %v1458
        %v1470 = vadd.f32 %v1430, %v1460
        %v1471 = vadd.f32 %v1431, %v1462
        %v1472 = vadd.f32 %v1432, %v1464
        %v1473 = vtanh.pop %v1469
        %v1474 = vtanh.pop %v1470
        %v1475 = vtanh.pop %v1471
        %v1476 = vtanh.pop %v1472
        %1481 = vrot.lane.b32.xlu0 %v1473, 64
        %v1482 = vpop.permute.xlu0 %1481
        %1483 = vrot.lane.b32.xlu0 %v1474, 64
        %v1484 = vpop.permute.xlu0 %1483
        %1485 = vrot.lane.b32.xlu0 %v1475, 64
        %v1486 = vpop.permute.xlu0 %1485
        %1487 = vrot.lane.b32.xlu0 %v1476, 64
        %v1488 = vpop.permute.xlu0 %1487
        %v1493 = vmul.f32 %v1379, %v1482
        %v1494 = vmul.f32 %v1394, %v1484
        %v1495 = vmul.f32 %v1409, %v1486
        %v1496 = vmul.f32 %v1424, %v1488
        %v1497 = vmul.f32 %v1493, %v696
        %v1498 = vmul.f32 %v1494, %v696
        %v1499 = vmul.f32 %v1495, %v696
        %v1500 = vmul.f32 %v1496, %v696
        %1505 = vrot.lane.b32.xlu0 %v1497, 32
        %v1506 = vpop.permute.xlu0 %1505
        %1507 = vrot.lane.b32.xlu0 %v1498, 32
        %v1508 = vpop.permute.xlu0 %1507
        %1509 = vrot.lane.b32.xlu0 %v1499, 32
        %v1510 = vpop.permute.xlu0 %1509
        %1511 = vrot.lane.b32.xlu0 %v1500, 32
        %v1512 = vpop.permute.xlu0 %1511
        %v1517 = vsel %vm408, %v1506, 0.0
        %1518 = vadd.xlane.f32.xlu0 %v1517
        %v1519 = vpop.xlane.xlu0 %1518
        %v1520 = vsel %vm408, %v1508, 0.0
        %1521 = vadd.xlane.f32.xlu0 %v1520
        %v1522 = vpop.xlane.xlu0 %1521
        %v1523 = vsel %vm408, %v1510, 0.0
        %1524 = vadd.xlane.f32.xlu0 %v1523
        %v1525 = vpop.xlane.xlu0 %1524
        %v1526 = vsel %vm408, %v1512, 0.0
        %1527 = vadd.xlane.f32.xlu0 %v1526
        %v1528 = vpop.xlane.xlu0 %1527
        %v1529 = vmax.f32 %v1260, %v1519
        %v1530 = vmax.f32 %v1261, %v1522
        %v1531 = vmax.f32 %v1262, %v1525
        %v1532 = vmax.f32 %v1263, %v1528
        %v1533 = vsub.f32 %v1260, %v1529
        %v1534 = vsub.f32 %v1261, %v1530
        %v1535 = vsub.f32 %v1262, %v1531
        %v1536 = vsub.f32 %v1263, %v1532
        %v1537 = vmul.f32 %v1533, 1.442695
        %v1538 = vpow.pop %v1537
        %v1539 = vmul.f32 %v1534, 1.442695
        %v1540 = vpow.pop %v1539
        %v1541 = vmul.f32 %v1535, 1.442695
        %v1542 = vpow.pop %v1541
        %v1543 = vmul.f32 %v1536, 1.442695
        %v1544 = vpow.pop %v1543
        %v1545 = vsub.f32 %v1519, %v1529
        %v1546 = vsub.f32 %v1522, %v1530
        %v1547 = vsub.f32 %v1525, %v1531
        %v1548 = vsub.f32 %v1528, %v1532
        %v1549 = vmul.f32 %v1545, 1.442695
        %v1550 = vpow.pop %v1549
        %v1551 = vmul.f32 %v1546, 1.442695
        %v1552 = vpow.pop %v1551
        %v1553 = vmul.f32 %v1547, 1.442695
        %v1554 = vpow.pop %v1553
        %v1555 = vmul.f32 %v1548, 1.442695
        %v1556 = vpow.pop %v1555
        %v1557 = vmul.f32 %v1538, %v1292
        %v1558 = vmul.f32 %v1540, %v1293
        %v1559 = vmul.f32 %v1542, %v1294
        %v1560 = vmul.f32 %v1544, %v1295
        %v1561 = vadd.f32 %v1557, %v1550
        %v1562 = vadd.f32 %v1558, %v1552
        %v1563 = vadd.f32 %v1559, %v1554
        %v1564 = vadd.f32 %v1560, %v1556
        %v1565 = vmul.f32 %v1538, %v1304
        %v1566 = vmul.f32 %v1540, %v1305
        %v1567 = vmul.f32 %v1542, %v1306
        %v1568 = vmul.f32 %v1544, %v1307
        %v1569 = vmul.f32 %v1550, %v1493
        %v1570 = vmul.f32 %v1552, %v1494
        %v1571 = vmul.f32 %v1554, %v1495
        %v1572 = vmul.f32 %v1556, %v1496
        %v1573 = vadd.f32 %v1565, %v1569
        %v1574 = vadd.f32 %v1566, %v1570
        %v1575 = vadd.f32 %v1567, %v1571
        %v1576 = vadd.f32 %v1568, %v1572
        %v1577 = vrcp.pop %v1561
        %v1578 = vrcp.pop %v1562
        %v1579 = vrcp.pop %v1563
        %v1580 = vrcp.pop %v1564
        %v1581 = vmul.f32 %v1573, %v1577
        %v1582 = vmul.f32 %v1574, %v1578
        %v1583 = vmul.f32 %v1575, %v1579
        %v1584 = vmul.f32 %v1576, %v1580
        %1589 = vrot.lane.b32.xlu0 %v1581, 32
        %v1590 = vpop.permute.xlu0 %1589
        %1591 = vrot.lane.b32.xlu0 %v1582, 32
        %v1592 = vpop.permute.xlu0 %1591
        %1593 = vrot.lane.b32.xlu0 %v1583, 32
        %v1594 = vpop.permute.xlu0 %1593
        %1595 = vrot.lane.b32.xlu0 %v1584, 32
        %v1596 = vpop.permute.xlu0 %1595
        %1601 = vst.msk [vmem:[%s329] sm:$0xff] %vm408, %v1590
        %1602 = vst.msk [vmem:[%s329 + $0x8] sm:$0xff] %vm408, %v1592
        %1603 = vst.msk [vmem:[%s329 + $0x10] sm:$0xff] %vm408, %v1594
        %1604 = vst.msk [vmem:[%s329 + $0x18] sm:$0xff] %vm408, %v1596
        %s1605 = smul.u32 4, %s16
        %p1606 = scmp.lt.s32.totalorder %s1605, 7
        %s1607 = scalar_select %p1606, %s1605, 7
        %s1608 = smul.addr %s1607, 8
        %s1609 = scalar_lea.vmem %s5, %s1608
        // Predicated region
        $region82: #{tpu_custom_call.1} parent=76 // pred_check
          %p1610 = pneg %p144
        $region83: #{tpu_custom_call.1} parent=76 // pred_check_branch
          %1612 = sbr.rel (%p1610) target = $region85
        $region84: #{tpu_custom_call.1} parent=76 // pred_region
          %s1613 = smul.u32 4, %s16
        $region85: #{tpu_custom_call.1} parent=76 // pred_fallthru
          _
      $region77: #{tpu_custom_call.1} parent=5 // pred_fallthru
        _
      %p1614 = scmp.le.s32.totalorder 2, %s11
      // Predicated region
      $region86: #{tpu_custom_call.1} parent=5 // pred_check
        %p1615 = pneg %p1614
      $region87: #{tpu_custom_call.1} parent=5 // pred_check_branch
        %1617 = sbr.rel (%p1615) target = $region89
      $region88: #{tpu_custom_call.1} parent=5 // pred_region
        %s1618 = ssub.s32 %s11, 2
        // Predicated region
        $region90: #{tpu_custom_call.1} parent=88 // pred_check
          %p1619 = pneg %p150
        $region91: #{tpu_custom_call.1} parent=88 // pred_check_branch
          %1621 = sbr.rel (%p1619) target = $region93
        $region92: #{tpu_custom_call.1} parent=88 // pred_region
          %s1622 = smul.u32 4, %s17
          %p1623 = scmp.lt.s32.totalorder %s1622, 7
          %s1624 = scalar_select %p1623, %s1622, 7
          %s1625 = smul.addr %s1624, 8
          %s1626 = scalar_lea.vmem %s5, %s1625
        $region93: #{tpu_custom_call.1} parent=88 // pred_fallthru
          _
      $region89: #{tpu_custom_call.1} parent=5 // pred_fallthru
        _
    $region6: #{tpu_custom_call.1} parent=1 // loop_footer
      %s15 = sadd.s32 1, %s11
    $region7: #{tpu_custom_call.1} parent=1 // loop_footer_branch
      %10 = sbr.rel target = $region3
    $region8: #{tpu_custom_call.1} parent=1 // loop_exit
      _

</llo_original>
